<compile_context>
chip_gen: v7x
topology: tpu7x:2x2x1
jax: 0.10.0
libtpu: 0.0.40
codegen_flags: <defaults>
</compile_context>

<pallas_src>
import jax
import jax.numpy as jnp
import numpy as np
from jax.experimental import pallas as pl
from jax.experimental.pallas import tpu as pltpu

KH = KW = 4   # kernel_size
STRIDE = 2
PAD = 1


def _dc_phase_kernel(x_ref, w_ref, b_ref, o_ref):
    """Compute all 4 parity phases for one sample.

    x_ref: (1, Ci, H+2, W+2) f32   input padded by 1 on each spatial side
    w_ref: (2, 2, Co, 4*Ci) bf16   per-phase weights, K order = (dy, dx, ci)
    b_ref: (Co, 1) f32             bias (broadcast over lanes)
    o_ref: (1, 2, 2, Co, H*W) f32  per-phase NCHW-ordered outputs
    """
    ci = x_ref.shape[1]
    h = x_ref.shape[2] - 2
    w = x_ref.shape[3] - 2

    # The 9 shifted (Ci, H, W) windows of the padded plane, flattened so that
    # H*W lands on the lane dimension.
    win = {}
    for oy in range(3):
        for ox in range(3):
            win[(oy, ox)] = x_ref[0, :, oy:oy + h, ox:ox + w].reshape(ci, h * w)

    b = b_ref[...]  # (Co, 1)

    for py in range(2):
        for px in range(2):
            # Transposed patch matrix for this phase: (4*Ci, H*W),
            # tap order (dy, dx, ci) -- matches the weight layout.
            p_t = jnp.concatenate(
                [win[(py + dy, px + dx)] for dy in range(2) for dx in range(2)],
                axis=0,
            ).astype(jnp.bfloat16)
            acc = jnp.dot(
                w_ref[py, px], p_t, preferred_element_type=jnp.float32
            )  # (Co, H*W), lane-dense
            o_ref[0, py, px, :, :] = jnp.maximum(acc + b, 0.0).astype(o_ref.dtype)


@jax.jit
def dc_forward(x, weight, bias):
    """x: (N, Ci, H, W) f32. weight: (Ci, Co, 4, 4) (PyTorch ConvTranspose2d
    layout). bias: (Co,). Returns (N, Co, 2H, 2W) f32 (NCHW)."""
    n, ci, h, w = x.shape
    co = weight.shape[1]

    # Pad by 1 on each spatial side; out-of-range taps then read zeros.
    xp = jnp.pad(x, ((0, 0), (0, 0), (1, 1), (1, 1))).astype(jnp.float32)

    # Per-phase weights.  Output pixel (2*iy + py, 2*ix + px) gets contributions
    # from padded input (iy + py + dy, ix + px + dx) with kernel tap
    # (ky, kx) = (3 - py - 2*dy, 3 - px - 2*dx).
    phase_rows = []
    for py in range(2):
        row = []
        for px in range(2):
            blocks = []
            for dy in range(2):
                for dx in range(2):
                    ky = 3 - py - 2 * dy
                    kx = 3 - px - 2 * dx
                    blocks.append(weight[:, :, ky, kx].T)   # (Co, Ci)
            row.append(jnp.concatenate(blocks, axis=1))     # (Co, 4*Ci)
        phase_rows.append(jnp.stack(row, axis=0))
    wp = jnp.stack(phase_rows, axis=0).astype(jnp.bfloat16)  # (2, 2, Co, 4*Ci)
    bm = bias.reshape(co, 1).astype(jnp.float32)

    out = pl.pallas_call(
        _dc_phase_kernel,
        out_shape=jax.ShapeDtypeStruct((n, 2, 2, co, h * w), jnp.float32),
        grid_spec=pltpu.PrefetchScalarGridSpec(
            num_scalar_prefetch=0,
            grid=(n,),
            in_specs=[
                pl.BlockSpec((1, ci, h + 2, w + 2), lambda i: (i, 0, 0, 0)),
                pl.BlockSpec((2, 2, co, 4 * ci), lambda i: (0, 0, 0, 0)),
                pl.BlockSpec((co, 1), lambda i: (0, 0)),
            ],
            out_specs=pl.BlockSpec(
                (1, 2, 2, co, h * w), lambda i: (i, 0, 0, 0, 0)
            ),
        ),
        compiler_params=pltpu.CompilerParams(
            dimension_semantics=("parallel",)
        ),
    )(xp, wp, bm)

    # out[n, py, px, co, iy*W + ix] -> y[n, co, 2*iy + py, 2*ix + px]
    y = out.reshape(n, 2, 2, co, h, w)
    y = y.transpose(0, 3, 4, 1, 5, 2)          # (n, co, iy, py, ix, px)
    return y.reshape(n, co, 2 * h, 2 * w)


def _reference(x, weight, bias):
    """Independent pure-JAX reference for ConvTranspose2d(4, 2, 1) + ReLU."""
    n, ci, h, w = x.shape
    co = weight.shape[1]
    t = jnp.einsum("nchw,cokl->noklhw", x, weight,
                   precision=jax.lax.Precision.HIGHEST)
    y_full = jnp.zeros((n, co, 2 * h + 2, 2 * w + 2), jnp.float32)
    for ky in range(KH):
        for kx in range(KW):
            y_full = y_full.at[:, :, ky:ky + 2 * h:2, kx:kx + 2 * w:2].add(
                t[:, :, ky, kx]
            )
    y = y_full[:, :, PAD:PAD + 2 * h, PAD:PAD + 2 * w] + bias.reshape(1, co, 1, 1)
    return jnp.maximum(y, 0.0)


if __name__ == "__main__":
    key = jax.random.PRNGKey(0)
    k_x, k_w, k_b = jax.random.split(key, 3)

    N, Cin, Cout, H, W = 2, 4, 8, 16, 16

    x = jax.random.normal(k_x, (N, Cin, H, W), dtype=jnp.float32)

    # PyTorch ConvTranspose2d default init: uniform(-b, b), b = 1/sqrt(fan_in).
    bound = 1.0 / np.sqrt(Cin * KH * KW)
    weight = jax.random.uniform(
        k_w, (Cin, Cout, KH, KW), dtype=jnp.float32, minval=-bound, maxval=bound
    )
    bias = jax.random.uniform(
        k_b, (Cout,), dtype=jnp.float32, minval=-bound, maxval=bound
    )

    y = jax.block_until_ready(dc_forward(x, weight, bias))
    assert y.shape == (N, Cout, 2 * H, 2 * W), y.shape

    # Tight check: reference evaluated on the same bf16-rounded operands the
    # kernel feeds to the MXU (both accumulate in f32).
    x_r = x.astype(jnp.bfloat16).astype(jnp.float32)
    w_r = weight.astype(jnp.bfloat16).astype(jnp.float32)
    y_ref_r = jax.block_until_ready(_reference(x_r, w_r, bias))
    np.testing.assert_allclose(np.asarray(y), np.asarray(y_ref_r),
                               rtol=2e-3, atol=2e-3)

    # Loose check against the full-f32 module semantics (bf16 operand rounding).
    y_ref = jax.block_until_ready(_reference(x, weight, bias))
    np.testing.assert_allclose(np.asarray(y), np.asarray(y_ref),
                               rtol=5e-2, atol=5e-2)

    print("KERNEL_OK")
</pallas_src>

<mosaic_0001>
module attributes {stable_mosaic.version = 11 : i64} {
  func.func @_dc_phase_kernel(%arg0: i32, %arg1: memref<1x4x18x18xf32, #tpu.memory_space<vmem>>, %arg2: memref<2x2x8x16xbf16, #tpu.memory_space<vmem>>, %arg3: memref<8x1xf32, #tpu.memory_space<vmem>>, %arg4: memref<1x2x2x8x256xf32, #tpu.memory_space<vmem>>) attributes {dimension_semantics = [#tpu.dimension_semantics<parallel>], iteration_bounds = array<i64: 2>, scalar_prefetch = 0 : i64, scratch_operands = 0 : i64, tpu.core_type = #tpu.core_type<tc>, window_params = [{transform_indices = @transform_0, window_bounds = array<i64: 1, 4, 18, 18>}, {pipeline_mode = #tpu.pipeline_mode<synchronous>, transform_indices = @transform_1, window_bounds = array<i64: 2, 2, 8, 16>}, {pipeline_mode = #tpu.pipeline_mode<synchronous>, transform_indices = @transform_2, window_bounds = array<i64: 8, 1>}, {transform_indices = @transform_3, window_bounds = array<i64: 1, 2, 2, 8, 256>}]} {
    %c0 = arith.constant 0 : index
    %c0_0 = arith.constant 0 : index
    %c0_1 = arith.constant 0 : index
    %c0_2 = arith.constant 0 : index
    %0 = vector.load %arg1[%c0, %c0_0, %c0_1, %c0_2] : memref<1x4x18x18xf32, #tpu.memory_space<vmem>>, vector<1x4x16x16xf32>
    %1 = vector.shape_cast %0 : vector<1x4x16x16xf32> to vector<4x16x16xf32>
    %2 = vector.shape_cast %1 : vector<4x16x16xf32> to vector<4x256xf32>
    %c0_3 = arith.constant 0 : index
    %c0_4 = arith.constant 0 : index
    %c0_5 = arith.constant 0 : index
    %c1 = arith.constant 1 : index
    %3 = vector.load %arg1[%c0_3, %c0_4, %c0_5, %c1] : memref<1x4x18x18xf32, #tpu.memory_space<vmem>>, vector<1x4x16x16xf32>
    %4 = vector.shape_cast %3 : vector<1x4x16x16xf32> to vector<4x16x16xf32>
    %5 = vector.shape_cast %4 : vector<4x16x16xf32> to vector<4x256xf32>
    %c0_6 = arith.constant 0 : index
    %c0_7 = arith.constant 0 : index
    %c0_8 = arith.constant 0 : index
    %c2 = arith.constant 2 : index
    %6 = vector.load %arg1[%c0_6, %c0_7, %c0_8, %c2] : memref<1x4x18x18xf32, #tpu.memory_space<vmem>>, vector<1x4x16x16xf32>
    %7 = vector.shape_cast %6 : vector<1x4x16x16xf32> to vector<4x16x16xf32>
    %8 = vector.shape_cast %7 : vector<4x16x16xf32> to vector<4x256xf32>
    %c0_9 = arith.constant 0 : index
    %c0_10 = arith.constant 0 : index
    %c1_11 = arith.constant 1 : index
    %c0_12 = arith.constant 0 : index
    %9 = vector.load %arg1[%c0_9, %c0_10, %c1_11, %c0_12] : memref<1x4x18x18xf32, #tpu.memory_space<vmem>>, vector<1x4x16x16xf32>
    %10 = vector.shape_cast %9 : vector<1x4x16x16xf32> to vector<4x16x16xf32>
    %11 = vector.shape_cast %10 : vector<4x16x16xf32> to vector<4x256xf32>
    %c0_13 = arith.constant 0 : index
    %c0_14 = arith.constant 0 : index
    %c1_15 = arith.constant 1 : index
    %c1_16 = arith.constant 1 : index
    %12 = vector.load %arg1[%c0_13, %c0_14, %c1_15, %c1_16] : memref<1x4x18x18xf32, #tpu.memory_space<vmem>>, vector<1x4x16x16xf32>
    %13 = vector.shape_cast %12 : vector<1x4x16x16xf32> to vector<4x16x16xf32>
    %14 = vector.shape_cast %13 : vector<4x16x16xf32> to vector<4x256xf32>
    %c0_17 = arith.constant 0 : index
    %c0_18 = arith.constant 0 : index
    %c1_19 = arith.constant 1 : index
    %c2_20 = arith.constant 2 : index
    %15 = vector.load %arg1[%c0_17, %c0_18, %c1_19, %c2_20] : memref<1x4x18x18xf32, #tpu.memory_space<vmem>>, vector<1x4x16x16xf32>
    %16 = vector.shape_cast %15 : vector<1x4x16x16xf32> to vector<4x16x16xf32>
    %17 = vector.shape_cast %16 : vector<4x16x16xf32> to vector<4x256xf32>
    %c0_21 = arith.constant 0 : index
    %c0_22 = arith.constant 0 : index
    %c2_23 = arith.constant 2 : index
    %c0_24 = arith.constant 0 : index
    %18 = vector.load %arg1[%c0_21, %c0_22, %c2_23, %c0_24] : memref<1x4x18x18xf32, #tpu.memory_space<vmem>>, vector<1x4x16x16xf32>
    %19 = vector.shape_cast %18 : vector<1x4x16x16xf32> to vector<4x16x16xf32>
    %20 = vector.shape_cast %19 : vector<4x16x16xf32> to vector<4x256xf32>
    %c0_25 = arith.constant 0 : index
    %c0_26 = arith.constant 0 : index
    %c2_27 = arith.constant 2 : index
    %c1_28 = arith.constant 1 : index
    %21 = vector.load %arg1[%c0_25, %c0_26, %c2_27, %c1_28] : memref<1x4x18x18xf32, #tpu.memory_space<vmem>>, vector<1x4x16x16xf32>
    %22 = vector.shape_cast %21 : vector<1x4x16x16xf32> to vector<4x16x16xf32>
    %23 = vector.shape_cast %22 : vector<4x16x16xf32> to vector<4x256xf32>
    %c0_29 = arith.constant 0 : index
    %c0_30 = arith.constant 0 : index
    %c2_31 = arith.constant 2 : index
    %c2_32 = arith.constant 2 : index
    %24 = vector.load %arg1[%c0_29, %c0_30, %c2_31, %c2_32] : memref<1x4x18x18xf32, #tpu.memory_space<vmem>>, vector<1x4x16x16xf32>
    %25 = vector.shape_cast %24 : vector<1x4x16x16xf32> to vector<4x16x16xf32>
    %26 = vector.shape_cast %25 : vector<4x16x16xf32> to vector<4x256xf32>
    %c0_33 = arith.constant 0 : index
    %c0_34 = arith.constant 0 : index
    %27 = vector.load %arg3[%c0_33, %c0_34] : memref<8x1xf32, #tpu.memory_space<vmem>>, vector<8x1xf32>
    %28 = tpu.concatenate %2, %5, %11, %14 in 0 : vector<4x256xf32>, vector<4x256xf32>, vector<4x256xf32>, vector<4x256xf32> -> vector<16x256xf32>
    %29 = arith.truncf %28 : vector<16x256xf32> to vector<16x256xbf16>
    %c0_35 = arith.constant 0 : index
    %c0_36 = arith.constant 0 : index
    %c0_37 = arith.constant 0 : index
    %c0_38 = arith.constant 0 : index
    %30 = vector.load %arg2[%c0_35, %c0_36, %c0_37, %c0_38] : memref<2x2x8x16xbf16, #tpu.memory_space<vmem>>, vector<1x1x8x16xbf16>
    %31 = vector.shape_cast %30 : vector<1x1x8x16xbf16> to vector<8x16xbf16>
    %cst = arith.constant dense<0.000000e+00> : vector<8x256xf32>
    %32 = tpu.matmul %31, %29, %cst {dimension_numbers = #tpu.dot_dimension_numbers<[1], [0], [0], [1], [0, 0, 1, 1], [], []>} : vector<8x16xbf16>, vector<16x256xbf16>, vector<8x256xf32> -> vector<8x256xf32>
    %33 = vector.broadcast %27 : vector<8x1xf32> to vector<8x256xf32>
    %34 = arith.addf %32, %33 : vector<8x256xf32>
    %cst_39 = arith.constant 0.000000e+00 : f32
    %35 = vector.broadcast %cst_39 : f32 to vector<8x256xf32>
    %36 = arith.maximumf %34, %35 : vector<8x256xf32>
    %c0_40 = arith.constant 0 : index
    %c0_41 = arith.constant 0 : index
    %c0_42 = arith.constant 0 : index
    %c0_43 = arith.constant 0 : index
    %c0_44 = arith.constant 0 : index
    %37 = vector.load %arg4[%c0_40, %c0_41, %c0_42, %c0_43, %c0_44] : memref<1x2x2x8x256xf32, #tpu.memory_space<vmem>>, vector<1x1x1x8x256xf32>
    %38 = vector.shape_cast %37 : vector<1x1x1x8x256xf32> to vector<8x256xf32>
    %39 = vector.shape_cast %36 : vector<8x256xf32> to vector<1x1x1x8x256xf32>
    tpu.vector_store %arg4[%c0_40, %c0_41, %c0_42, %c0_43, %c0_44], %39 {strides = array<i32>} : memref<1x2x2x8x256xf32, #tpu.memory_space<vmem>>, vector<1x1x1x8x256xf32>,
    %40 = tpu.concatenate %5, %8, %14, %17 in 0 : vector<4x256xf32>, vector<4x256xf32>, vector<4x256xf32>, vector<4x256xf32> -> vector<16x256xf32>
    %41 = arith.truncf %40 : vector<16x256xf32> to vector<16x256xbf16>
    %c0_45 = arith.constant 0 : index
    %c1_46 = arith.constant 1 : index
    %c0_47 = arith.constant 0 : index
    %c0_48 = arith.constant 0 : index
    %42 = vector.load %arg2[%c0_45, %c1_46, %c0_47, %c0_48] : memref<2x2x8x16xbf16, #tpu.memory_space<vmem>>, vector<1x1x8x16xbf16>
    %43 = vector.shape_cast %42 : vector<1x1x8x16xbf16> to vector<8x16xbf16>
    %cst_49 = arith.constant dense<0.000000e+00> : vector<8x256xf32>
    %44 = tpu.matmul %43, %41, %cst_49 {dimension_numbers = #tpu.dot_dimension_numbers<[1], [0], [0], [1], [0, 0, 1, 1], [], []>} : vector<8x16xbf16>, vector<16x256xbf16>, vector<8x256xf32> -> vector<8x256xf32>
    %45 = vector.broadcast %27 : vector<8x1xf32> to vector<8x256xf32>
    %46 = arith.addf %44, %45 : vector<8x256xf32>
    %cst_50 = arith.constant 0.000000e+00 : f32
    %47 = vector.broadcast %cst_50 : f32 to vector<8x256xf32>
    %48 = arith.maximumf %46, %47 : vector<8x256xf32>
    %c0_51 = arith.constant 0 : index
    %c0_52 = arith.constant 0 : index
    %c1_53 = arith.constant 1 : index
    %c0_54 = arith.constant 0 : index
    %c0_55 = arith.constant 0 : index
    %49 = vector.load %arg4[%c0_51, %c0_52, %c1_53, %c0_54, %c0_55] : memref<1x2x2x8x256xf32, #tpu.memory_space<vmem>>, vector<1x1x1x8x256xf32>
    %50 = vector.shape_cast %49 : vector<1x1x1x8x256xf32> to vector<8x256xf32>
    %51 = vector.shape_cast %48 : vector<8x256xf32> to vector<1x1x1x8x256xf32>
    tpu.vector_store %arg4[%c0_51, %c0_52, %c1_53, %c0_54, %c0_55], %51 {strides = array<i32>} : memref<1x2x2x8x256xf32, #tpu.memory_space<vmem>>, vector<1x1x1x8x256xf32>,
    %52 = tpu.concatenate %11, %14, %20, %23 in 0 : vector<4x256xf32>, vector<4x256xf32>, vector<4x256xf32>, vector<4x256xf32> -> vector<16x256xf32>
    %53 = arith.truncf %52 : vector<16x256xf32> to vector<16x256xbf16>
    %c1_56 = arith.constant 1 : index
    %c0_57 = arith.constant 0 : index
    %c0_58 = arith.constant 0 : index
    %c0_59 = arith.constant 0 : index
    %54 = vector.load %arg2[%c1_56, %c0_57, %c0_58, %c0_59] : memref<2x2x8x16xbf16, #tpu.memory_space<vmem>>, vector<1x1x8x16xbf16>
    %55 = vector.shape_cast %54 : vector<1x1x8x16xbf16> to vector<8x16xbf16>
    %cst_60 = arith.constant dense<0.000000e+00> : vector<8x256xf32>
    %56 = tpu.matmul %55, %53, %cst_60 {dimension_numbers = #tpu.dot_dimension_numbers<[1], [0], [0], [1], [0, 0, 1, 1], [], []>} : vector<8x16xbf16>, vector<16x256xbf16>, vector<8x256xf32> -> vector<8x256xf32>
    %57 = vector.broadcast %27 : vector<8x1xf32> to vector<8x256xf32>
    %58 = arith.addf %56, %57 : vector<8x256xf32>
    %cst_61 = arith.constant 0.000000e+00 : f32
    %59 = vector.broadcast %cst_61 : f32 to vector<8x256xf32>
    %60 = arith.maximumf %58, %59 : vector<8x256xf32>
    %c0_62 = arith.constant 0 : index
    %c1_63 = arith.constant 1 : index
    %c0_64 = arith.constant 0 : index
    %c0_65 = arith.constant 0 : index
    %c0_66 = arith.constant 0 : index
    %61 = vector.load %arg4[%c0_62, %c1_63, %c0_64, %c0_65, %c0_66] : memref<1x2x2x8x256xf32, #tpu.memory_space<vmem>>, vector<1x1x1x8x256xf32>
    %62 = vector.shape_cast %61 : vector<1x1x1x8x256xf32> to vector<8x256xf32>
    %63 = vector.shape_cast %60 : vector<8x256xf32> to vector<1x1x1x8x256xf32>
    tpu.vector_store %arg4[%c0_62, %c1_63, %c0_64, %c0_65, %c0_66], %63 {strides = array<i32>} : memref<1x2x2x8x256xf32, #tpu.memory_space<vmem>>, vector<1x1x1x8x256xf32>,
    %64 = tpu.concatenate %14, %17, %23, %26 in 0 : vector<4x256xf32>, vector<4x256xf32>, vector<4x256xf32>, vector<4x256xf32> -> vector<16x256xf32>
    %65 = arith.truncf %64 : vector<16x256xf32> to vector<16x256xbf16>
    %c1_67 = arith.constant 1 : index
    %c1_68 = arith.constant 1 : index
    %c0_69 = arith.constant 0 : index
    %c0_70 = arith.constant 0 : index
    %66 = vector.load %arg2[%c1_67, %c1_68, %c0_69, %c0_70] : memref<2x2x8x16xbf16, #tpu.memory_space<vmem>>, vector<1x1x8x16xbf16>
    %67 = vector.shape_cast %66 : vector<1x1x8x16xbf16> to vector<8x16xbf16>
    %cst_71 = arith.constant dense<0.000000e+00> : vector<8x256xf32>
    %68 = tpu.matmul %67, %65, %cst_71 {dimension_numbers = #tpu.dot_dimension_numbers<[1], [0], [0], [1], [0, 0, 1, 1], [], []>} : vector<8x16xbf16>, vector<16x256xbf16>, vector<8x256xf32> -> vector<8x256xf32>
    %69 = vector.broadcast %27 : vector<8x1xf32> to vector<8x256xf32>
    %70 = arith.addf %68, %69 : vector<8x256xf32>
    %cst_72 = arith.constant 0.000000e+00 : f32
    %71 = vector.broadcast %cst_72 : f32 to vector<8x256xf32>
    %72 = arith.maximumf %70, %71 : vector<8x256xf32>
    %c0_73 = arith.constant 0 : index
    %c1_74 = arith.constant 1 : index
    %c1_75 = arith.constant 1 : index
    %c0_76 = arith.constant 0 : index
    %c0_77 = arith.constant 0 : index
    %73 = vector.load %arg4[%c0_73, %c1_74, %c1_75, %c0_76, %c0_77] : memref<1x2x2x8x256xf32, #tpu.memory_space<vmem>>, vector<1x1x1x8x256xf32>
    %74 = vector.shape_cast %73 : vector<1x1x1x8x256xf32> to vector<8x256xf32>
    %75 = vector.shape_cast %72 : vector<8x256xf32> to vector<1x1x1x8x256xf32>
    tpu.vector_store %arg4[%c0_73, %c1_74, %c1_75, %c0_76, %c0_77], %75 {strides = array<i32>} : memref<1x2x2x8x256xf32, #tpu.memory_space<vmem>>, vector<1x1x1x8x256xf32>,
    return
  }
  func.func @transform_0(%arg0: i32) -> (i32, i32, i32, i32) {
    %c0_i32 = arith.constant 0 : i32
    %c0_i32_0 = arith.constant 0 : i32
    %c0_i32_1 = arith.constant 0 : i32
    %c0_i32_2 = arith.constant 0 : i32
    return %arg0, %c0_i32, %c0_i32_0, %c0_i32_1 : i32, i32, i32, i32
  }
  func.func @transform_1(%arg0: i32) -> (i32, i32, i32, i32) {
    %c0_i32 = arith.constant 0 : i32
    %c0_i32_0 = arith.constant 0 : i32
    %c0_i32_1 = arith.constant 0 : i32
    %c0_i32_2 = arith.constant 0 : i32
    %c0_i32_3 = arith.constant 0 : i32
    return %c0_i32, %c0_i32_0, %c0_i32_1, %c0_i32_2 : i32, i32, i32, i32
  }
  func.func @transform_2(%arg0: i32) -> (i32, i32) {
    %c0_i32 = arith.constant 0 : i32
    %c0_i32_0 = arith.constant 0 : i32
    %c0_i32_1 = arith.constant 0 : i32
    return %c0_i32, %c0_i32_0 : i32, i32
  }
  func.func @transform_3(%arg0: i32) -> (i32, i32, i32, i32, i32) {
    %c0_i32 = arith.constant 0 : i32
    %c0_i32_0 = arith.constant 0 : i32
    %c0_i32_1 = arith.constant 0 : i32
    %c0_i32_2 = arith.constant 0 : i32
    %c0_i32_3 = arith.constant 0 : i32
    return %arg0, %c0_i32, %c0_i32_0, %c0_i32_1, %c0_i32_2 : i32, i32, i32, i32, i32
  }
}

</mosaic_0001>

<llo_original>
// kernel: dc_forward.1
$region0: #{dc_forward.1}
  #allocation0 [shape = 'u32[]', space=smem, size = 0x4, offset = 0x4, fixed_abs, tag = 'smem constant byte address 0x4 - core index']
  #allocation1 [shape = 'u32[144,128]{1,0:T(1,128)}', space=vmem, size = 0x12000, scoped, tag = 'internal scratch']
  %s0 = inlined_call_operand.vmem [shape: f32[2,4,18,18], index: 0, kind: input, shape index: {}]
  %s1 = inlined_call_operand.vmem [shape: bf16[2,2,8,16], index: 1, kind: input, shape index: {}]
  %s2 = inlined_call_operand.vmem [shape: f32[8,1], index: 2, kind: input, shape index: {}]
  %s3 = inlined_call_operand.vmem [shape: f32[2,2,2,8,256], index: 3, kind: output, shape index: {}]
  %s4 = sld [smem:[#allocation0]]
  $region45: #{dc_forward.1} parent=0
    _
  %s6 = ssub.s32 1, %s4
  %s7 = scalar_select 0, %s6, %s4
  loop: start=0, step=1, limit=4
  $region2: #{dc_forward.1} parent=0 // loop_pre_header
    _
  $region3: #{dc_forward.1} parent=0 // loop_header
    %s9 = sphi 0, %s13
    %p10 = scmp.ge.s32.totalorder %s9, 4
    %s19 = sphi 0, %s21
    %s22 = sphi 0, %s19
    %s23 = sphi 0, %s22
    %s39 = sphi 0, %s23
    %s43 = sphi 0, %s43
    %s45 = sphi 0, %s43
    %s46 = sphi 0, %s45
    %s60 = sphi 0, %s46
    %s64 = sphi 0, %s64
    %s66 = sphi 0, %s64
    %s67 = sphi 0, %s66
    %s81 = sphi 0, %s67
    %s87 = sphi 0, %s89
    %s90 = sphi 0, %s87
    %s91 = sphi 0, %s90
    %s107 = sphi 0, %s91
  $region4: #{dc_forward.1} parent=0 // loop_header_branch
    %12 = sbr.rel (%p10) target = $region8
  $region5: #{dc_forward.1} parent=0 // loop_body
    %s14 = ssub.s32 %s9, 1
    %s15 = ssub.s32 %s9, 2
    %s16 = sadd.s32 %s9, 1
    %s17 = ssub.s32 %s9, %s16
    %p18 = scmp.eq.s32.totalorder %s17, 0
    %s20 = sadd.s32 %s19, 1
    %s21 = scalar_select %p18, %s19, %s20
    %p24 = pneg %p18
    %p25 = scmp.eq.s32.totalorder %s9, 1
    %p26 = por %p24, %p25
    %p27 = scmp.ne.s32.totalorder %s19, %s22
    %p28 = scmp.eq.s32.totalorder %s9, 0
    %p29 = por %p27, %p28
    %p30 = scmp.ne.s32.totalorder %s19, %s22
    %p31 = scmp.eq.s32.totalorder %s14, 1
    %p32 = por %p30, %p31
    %p33 = scmp.ne.s32.totalorder %s22, %s23
    %p34 = scmp.eq.s32.totalorder %s14, 0
    %p35 = por %p33, %p34
    %p36 = scmp.ne.s32.totalorder %s22, %s23
    %p37 = scmp.eq.s32.totalorder %s15, 1
    %p38 = por %p36, %p37
    %p40 = scmp.ne.s32.totalorder %s23, %s39
    %p41 = scmp.eq.s32.totalorder %s15, 0
    %p42 = por %p40, %p41
    %s44 = sadd.s32 %s43, 1
    %p47 = scmp.eq.s32.totalorder %s9, 1
    %p48 = scmp.ne.s32.totalorder %s43, %s45
    %p49 = scmp.eq.s32.totalorder %s9, 0
    %p50 = por %p48, %p49
    %p51 = scmp.ne.s32.totalorder %s43, %s45
    %p52 = scmp.eq.s32.totalorder %s14, 1
    %p53 = por %p51, %p52
    %p54 = scmp.ne.s32.totalorder %s45, %s46
    %p55 = scmp.eq.s32.totalorder %s14, 0
    %p56 = por %p54, %p55
    %p57 = scmp.ne.s32.totalorder %s45, %s46
    %p58 = scmp.eq.s32.totalorder %s15, 1
    %p59 = por %p57, %p58
    %p61 = scmp.ne.s32.totalorder %s46, %s60
    %p62 = scmp.eq.s32.totalorder %s15, 0
    %p63 = por %p61, %p62
    %s65 = sadd.s32 %s64, 1
    %p68 = scmp.eq.s32.totalorder %s9, 1
    %p69 = scmp.ne.s32.totalorder %s64, %s66
    %p70 = scmp.eq.s32.totalorder %s9, 0
    %p71 = por %p69, %p70
    %p72 = scmp.ne.s32.totalorder %s64, %s66
    %p73 = scmp.eq.s32.totalorder %s14, 1
    %p74 = por %p72, %p73
    %p75 = scmp.ne.s32.totalorder %s66, %s67
    %p76 = scmp.eq.s32.totalorder %s14, 0
    %p77 = por %p75, %p76
    %p78 = scmp.ne.s32.totalorder %s66, %s67
    %p79 = scmp.eq.s32.totalorder %s15, 1
    %p80 = por %p78, %p79
    %p82 = scmp.ne.s32.totalorder %s67, %s81
    %p83 = scmp.eq.s32.totalorder %s15, 0
    %p84 = por %p82, %p83
    %s85 = ssub.s32 %s9, %s16
    %p86 = scmp.eq.s32.totalorder %s85, 0
    %s88 = sadd.s32 %s87, 1
    %s89 = scalar_select %p86, %s87, %s88
    %p92 = pneg %p86
    %p93 = scmp.eq.s32.totalorder %s9, 1
    %p94 = por %p92, %p93
    %p95 = scmp.ne.s32.totalorder %s87, %s90
    %p96 = scmp.eq.s32.totalorder %s9, 0
    %p97 = por %p95, %p96
    %p98 = scmp.ne.s32.totalorder %s87, %s90
    %p99 = scmp.eq.s32.totalorder %s14, 1
    %p100 = por %p98, %p99
    %p101 = scmp.ne.s32.totalorder %s90, %s91
    %p102 = scmp.eq.s32.totalorder %s14, 0
    %p103 = por %p101, %p102
    %p104 = scmp.ne.s32.totalorder %s90, %s91
    %p105 = scmp.eq.s32.totalorder %s15, 1
    %p106 = por %p104, %p105
    %p108 = scmp.ne.s32.totalorder %s91, %s107
    %p109 = scmp.eq.s32.totalorder %s15, 0
    %p110 = por %p108, %p109
    %p111 = scmp.le.s32.totalorder 1, %s9
    %p112 = scmp.lt.s32.totalorder %s9, 3
    %p113 = pnand %p111, %p112
    %p114 = pneg %p113
    // Predicated region
    $region9: #{dc_forward.1} parent=5 // pred_check
      _
    $region10: #{dc_forward.1} parent=5 // pred_check_branch
      %116 = sbr.rel (%p113) target = $region12
    $region11: #{dc_forward.1} parent=5 // pred_region
      %s117 = ssub.s32 %s9, 1
      // Predicated region
      $region13: #{dc_forward.1} parent=11 // pred_check
        %p118 = pneg %p56
      $region14: #{dc_forward.1} parent=11 // pred_check_branch
        %120 = sbr.rel (%p118) target = $region16
      $region15: #{dc_forward.1} parent=11 // pred_region
        _
      $region16: #{dc_forward.1} parent=11 // pred_fallthru
        _
      // Predicated region
      $region17: #{dc_forward.1} parent=11 // pred_check
        %p121 = pneg %p77
      $region18: #{dc_forward.1} parent=11 // pred_check_branch
        %123 = sbr.rel (%p121) target = $region20
      $region19: #{dc_forward.1} parent=11 // pred_region
        _
      $region20: #{dc_forward.1} parent=11 // pred_fallthru
        _
    $region12: #{dc_forward.1} parent=5 // pred_fallthru
      _
    %p124 = scmp.lt.s32.totalorder %s9, 2
    // Predicated region
    $region21: #{dc_forward.1} parent=5 // pred_check
      %p125 = pneg %p124
    $region22: #{dc_forward.1} parent=5 // pred_check_branch
      %127 = sbr.rel (%p125) target = $region24
    $region23: #{dc_forward.1} parent=5 // pred_region
      // Predicated region
      $region25: #{dc_forward.1} parent=23 // pred_check
        %p128 = pneg %p29
      $region26: #{dc_forward.1} parent=23 // pred_check_branch
        %130 = sbr.rel (%p128) target = $region28
      $region27: #{dc_forward.1} parent=23 // pred_region
        %p131 = scmp.lt.s32.totalorder %s9, 1
        %s132 = scalar_select %p131, %s9, 1
        %s133 = smul.addr %s132, 12
        %s134 = smul.addr %s133, 8
        %s135 = scalar_lea.vmem %s0, %s134
      $region28: #{dc_forward.1} parent=23 // pred_fallthru
        _
    $region24: #{dc_forward.1} parent=5 // pred_fallthru
      _
    %p136 = scmp.le.s32.totalorder 1, %s9
    %p137 = scmp.lt.s32.totalorder %s9, 3
    %p138 = pnand %p136, %p137
    %p139 = pneg %p138
    // Predicated region
    $region29: #{dc_forward.1} parent=5 // pred_check
      _
    $region30: #{dc_forward.1} parent=5 // pred_check_branch
      %141 = sbr.rel (%p138) target = $region32
    $region31: #{dc_forward.1} parent=5 // pred_region
      %s142 = ssub.s32 %s9, 1
      %p143 = scmp.lt.s32.totalorder %s14, 1
      %s144 = scalar_select %p143, %s14, 1
      %s145 = smul.addr %s144, 12
      %s146 = smul.addr %s145, 8
      %s147 = scalar_lea.vmem %s0, %s146
      %p148 = pneg %p35
      %p149 = pneg %p32
      %p150 = pneg %p56
      %p151 = pneg %p53
      %p152 = pneg %p77
      %p153 = pneg %p74
      %p154 = pneg %p103
      %p155 = pneg %p100
      %p156 = scmp.lt.s32.totalorder %s14, 1
      %s157 = scalar_select %p156, %s14, 1
      %s158 = smul.addr %s157, 8
      %s159 = smul.addr %s158, 8
      %s160 = scalar_lea.vmem %s3, %s159
      %p161 = scmp.lt.s32.totalorder %s14, 1
      %s162 = scalar_select %p161, %s14, 1
      %s163 = smul.addr %s162, 12
      %s164 = smul.addr %s163, 8
      %s165 = scalar_lea.vmem %s0, %s164
      %p166 = scmp.lt.s32.totalorder %s14, 1
      %s167 = scalar_select %p166, %s14, 1
      %s168 = smul.addr %s167, 8
      %s169 = smul.addr %s168, 8
      %s170 = scalar_lea.vmem %s3, %s169
      %v172 = vld [vmem:[%s165] sm:$0xff]
      %v173 = vld [vmem:[%s165 + $0x8] sm:$0xff]
      %v174 = vld [vmem:[%s165 + $0x18] sm:$0xff]
      %v175 = vld [vmem:[%s165 + $0x20] sm:$0xff]
      %v176 = vld [vmem:[%s165 + $0x30] sm:$0xff]
      %v177 = vld [vmem:[%s165 + $0x38] sm:$0xff]
      %v178 = vld [vmem:[%s165 + $0x48] sm:$0xff]
      %v179 = vld [vmem:[%s165 + $0x50] sm:$0xff]
      %v180 = vcombine.low %v172, %v176
      %v181 = vcombine.high %v172, %v176
      %v183 = vunpack.c.l.s4 1983009808
      %v184 = vunpack.c.0.s8 %v183
      %v185 = vlaneseq
      %v186 = vshrl.u32 %v185, 7
      %v187 = vsub.s32 %v184, %v186
      %v188 = vrot.slane %v180, %v187
      %v190 = vunpack.c.l.s4 1983009808
      %v191 = vunpack.c.0.s8 %v190
      %v192 = vlaneseq
      %v193 = vshrl.u32 %v192, 7
      %v194 = vsub.s32 %v191, %v193
      %v195 = vrot.slane %v181, %v194
      %v196 = vcombine.low %v174, %v178
      %v197 = vcombine.high %v174, %v178
      %v199 = vunpack.c.l.s4 1983009808
      %v200 = vunpack.c.0.s8 %v199
      %v201 = vlaneseq
      %v202 = vshrl.u32 %v201, 7
      %v203 = vsub.s32 %v200, %v202
      %v204 = vrot.slane %v196, %v203
      %v206 = vunpack.c.l.s4 1983009808
      %v207 = vunpack.c.0.s8 %v206
      %v208 = vlaneseq
      %v209 = vshrl.u32 %v208, 7
      %v210 = vsub.s32 %v207, %v209
      %v211 = vrot.slane %v197, %v210
      %v212 = vcombine.low %v188, %v204
      %v213 = vcombine.high %v188, %v204
      %v215 = vunpack.c.l.s4 1934713408
      %v216 = vunpack.c.0.s8 %v215
      %v217 = vlaneseq
      %v218 = vshrl.u32 %v217, 7
      %v219 = vsub.s32 %v216, %v218
      %v220 = vrot.slane %v212, %v219
      %v222 = vunpack.c.l.s4 1934713408
      %v223 = vunpack.c.0.s8 %v222
      %v224 = vlaneseq
      %v225 = vshrl.u32 %v224, 7
      %v226 = vsub.s32 %v223, %v225
      %v227 = vrot.slane %v213, %v226
      %v228 = vcombine.low %v195, %v211
      %v229 = vcombine.high %v195, %v211
      %v231 = vunpack.c.l.s4 1934713408
      %v232 = vunpack.c.0.s8 %v231
      %v233 = vlaneseq
      %v234 = vshrl.u32 %v233, 7
      %v235 = vsub.s32 %v232, %v234
      %v236 = vrot.slane %v228, %v235
      %v238 = vunpack.c.l.s4 1934713408
      %v239 = vunpack.c.0.s8 %v238
      %v240 = vlaneseq
      %v241 = vshrl.u32 %v240, 7
      %v242 = vsub.s32 %v239, %v241
      %v243 = vrot.slane %v229, %v242
      %v244 = vcombine.high %v220, 0.0
      %v245 = vcombine.high %v227, 0.0
      %v246 = vcombine.high %v236, 0.0
      %v247 = vcombine.high %v243, 0.0
      %v248 = vcombine.low %v173, %v177
      %v249 = vcombine.high %v173, %v177
      %v251 = vunpack.c.l.s4 1983009808
      %v252 = vunpack.c.0.s8 %v251
      %v253 = vlaneseq
      %v254 = vshrl.u32 %v253, 7
      %v255 = vsub.s32 %v252, %v254
      %v256 = vrot.slane %v248, %v255
      %v258 = vunpack.c.l.s4 1983009808
      %v259 = vunpack.c.0.s8 %v258
      %v260 = vlaneseq
      %v261 = vshrl.u32 %v260, 7
      %v262 = vsub.s32 %v259, %v261
      %v263 = vrot.slane %v249, %v262
      %v264 = vcombine.low %v175, %v179
      %v265 = vcombine.high %v175, %v179
      %v267 = vunpack.c.l.s4 1983009808
      %v268 = vunpack.c.0.s8 %v267
      %v269 = vlaneseq
      %v270 = vshrl.u32 %v269, 7
      %v271 = vsub.s32 %v268, %v270
      %v272 = vrot.slane %v264, %v271
      %v274 = vunpack.c.l.s4 1983009808
      %v275 = vunpack.c.0.s8 %v274
      %v276 = vlaneseq
      %v277 = vshrl.u32 %v276, 7
      %v278 = vsub.s32 %v275, %v277
      %v279 = vrot.slane %v265, %v278
      %v280 = vcombine.low %v256, %v272
      %v281 = vcombine.high %v256, %v272
      %v283 = vunpack.c.l.s4 1934713408
      %v284 = vunpack.c.0.s8 %v283
      %v285 = vlaneseq
      %v286 = vshrl.u32 %v285, 7
      %v287 = vsub.s32 %v284, %v286
      %v288 = vrot.slane %v280, %v287
      %v290 = vunpack.c.l.s4 1934713408
      %v291 = vunpack.c.0.s8 %v290
      %v292 = vlaneseq
      %v293 = vshrl.u32 %v292, 7
      %v294 = vsub.s32 %v291, %v293
      %v295 = vrot.slane %v281, %v294
      %v296 = vcombine.low %v263, %v279
      %v297 = vcombine.high %v263, %v279
      %v299 = vunpack.c.l.s4 1934713408
      %v300 = vunpack.c.0.s8 %v299
      %v301 = vlaneseq
      %v302 = vshrl.u32 %v301, 7
      %v303 = vsub.s32 %v300, %v302
      %v304 = vrot.slane %v296, %v303
      %v306 = vunpack.c.l.s4 1934713408
      %v307 = vunpack.c.0.s8 %v306
      %v308 = vlaneseq
      %v309 = vshrl.u32 %v308, 7
      %v310 = vsub.s32 %v307, %v309
      %v311 = vrot.slane %v297, %v310
      %v312 = vcombine.high %v288, 0.0
      %v313 = vcombine.high %v295, 0.0
      %v314 = vcombine.high %v304, 0.0
      %v315 = vcombine.high %v311, 0.0
      %317 = vrot.lane.b32.xlu0 %v244, 16
      %v318 = vpop.permute.xlu0 %317
      %321 = vrot.lane.b32.xlu0 %v227, 32
      %v322 = vpop.permute.xlu0 %321
      %325 = vrot.lane.b32.xlu0 %v245, 48
      %v326 = vpop.permute.xlu0 %325
      %329 = vrot.lane.b32.xlu0 %v236, 64
      %v330 = vpop.permute.xlu0 %329
      %333 = vrot.lane.b32.xlu0 %v246, 80
      %v334 = vpop.permute.xlu0 %333
      %337 = vrot.lane.b32.xlu0 %v243, 96
      %v338 = vpop.permute.xlu0 %337
      %341 = vrot.lane.b32.xlu0 %v247, 112
      %v342 = vpop.permute.xlu0 %341
      %345 = vrot.lane.b32.xlu0 %v312, 16
      %v346 = vpop.permute.xlu0 %345
      %349 = vrot.lane.b32.xlu0 %v295, 32
      %v350 = vpop.permute.xlu0 %349
      %353 = vrot.lane.b32.xlu0 %v313, 48
      %v354 = vpop.permute.xlu0 %353
      %357 = vrot.lane.b32.xlu0 %v304, 64
      %v358 = vpop.permute.xlu0 %357
      %361 = vrot.lane.b32.xlu0 %v314, 80
      %v362 = vpop.permute.xlu0 %361
      %365 = vrot.lane.b32.xlu0 %v311, 96
      %v366 = vpop.permute.xlu0 %365
      %369 = vrot.lane.b32.xlu0 %v315, 112
      %v370 = vpop.permute.xlu0 %369
      %vm372 = vcmask 130048
      %v373 = vsel %vm372, %v220, %v318
      %vm374 = vcmask 261120
      %v375 = vsel %vm374, %v373, %v322
      %vm376 = vcmask 392192
      %v377 = vsel %vm376, %v375, %v326
      %vm378 = vcmask 523264
      %v379 = vsel %vm378, %v377, %v330
      %vm380 = vcmask 654336
      %v381 = vsel %vm380, %v379, %v334
      %vm382 = vcmask 785408
      %v383 = vsel %vm382, %v381, %v338
      %vm384 = vcmask 916480
      %v385 = vsel %vm384, %v383, %v342
      %v386 = vsel %vm372, %v288, %v346
      %v387 = vsel %vm374, %v386, %v350
      %v388 = vsel %vm376, %v387, %v354
      %v389 = vsel %vm378, %v388, %v358
      %v390 = vsel %vm380, %v389, %v362
      %v391 = vsel %vm382, %v390, %v366
      %v392 = vsel %vm384, %v391, %v370
      %401 = vrot.lane.b32.xlu0 %v172, 127
      %v402 = vpop.permute.xlu0 %401
      %403 = vrot.lane.b32.xlu0 %v173, 127
      %v404 = vpop.permute.xlu0 %403
      %405 = vrot.lane.b32.xlu0 %v174, 127
      %v406 = vpop.permute.xlu0 %405
      %407 = vrot.lane.b32.xlu0 %v175, 127
      %v408 = vpop.permute.xlu0 %407
      %409 = vrot.lane.b32.xlu0 %v176, 127
      %v410 = vpop.permute.xlu0 %409
      %411 = vrot.lane.b32.xlu0 %v177, 127
      %v412 = vpop.permute.xlu0 %411
      %413 = vrot.lane.b32.xlu0 %v178, 127
      %v414 = vpop.permute.xlu0 %413
      %415 = vrot.lane.b32.xlu0 %v179, 127
      %v416 = vpop.permute.xlu0 %415
      %v425 = vcombine.low %v402, %v410
      %v426 = vcombine.high %v402, %v410
      %v428 = vunpack.c.l.s4 1983009808
      %v429 = vunpack.c.0.s8 %v428
      %v430 = vlaneseq
      %v431 = vshrl.u32 %v430, 7
      %v432 = vsub.s32 %v429, %v431
      %v433 = vrot.slane %v425, %v432
      %v435 = vunpack.c.l.s4 1983009808
      %v436 = vunpack.c.0.s8 %v435
      %v437 = vlaneseq
      %v438 = vshrl.u32 %v437, 7
      %v439 = vsub.s32 %v436, %v438
      %v440 = vrot.slane %v426, %v439
      %v441 = vcombine.low %v406, %v414
      %v442 = vcombine.high %v406, %v414
      %v444 = vunpack.c.l.s4 1983009808
      %v445 = vunpack.c.0.s8 %v444
      %v446 = vlaneseq
      %v447 = vshrl.u32 %v446, 7
      %v448 = vsub.s32 %v445, %v447
      %v449 = vrot.slane %v441, %v448
      %v451 = vunpack.c.l.s4 1983009808
      %v452 = vunpack.c.0.s8 %v451
      %v453 = vlaneseq
      %v454 = vshrl.u32 %v453, 7
      %v455 = vsub.s32 %v452, %v454
      %v456 = vrot.slane %v442, %v455
      %v457 = vcombine.low %v433, %v449
      %v458 = vcombine.high %v433, %v449
      %v460 = vunpack.c.l.s4 1934713408
      %v461 = vunpack.c.0.s8 %v460
      %v462 = vlaneseq
      %v463 = vshrl.u32 %v462, 7
      %v464 = vsub.s32 %v461, %v463
      %v465 = vrot.slane %v457, %v464
      %v467 = vunpack.c.l.s4 1934713408
      %v468 = vunpack.c.0.s8 %v467
      %v469 = vlaneseq
      %v470 = vshrl.u32 %v469, 7
      %v471 = vsub.s32 %v468, %v470
      %v472 = vrot.slane %v458, %v471
      %v473 = vcombine.low %v440, %v456
      %v474 = vcombine.high %v440, %v456
      %v476 = vunpack.c.l.s4 1934713408
      %v477 = vunpack.c.0.s8 %v476
      %v478 = vlaneseq
      %v479 = vshrl.u32 %v478, 7
      %v480 = vsub.s32 %v477, %v479
      %v481 = vrot.slane %v473, %v480
      %v483 = vunpack.c.l.s4 1934713408
      %v484 = vunpack.c.0.s8 %v483
      %v485 = vlaneseq
      %v486 = vshrl.u32 %v485, 7
      %v487 = vsub.s32 %v484, %v486
      %v488 = vrot.slane %v474, %v487
      %v489 = vcombine.high %v465, 0.0
      %v490 = vcombine.high %v472, 0.0
      %v491 = vcombine.high %v481, 0.0
      %v492 = vcombine.high %v488, 0.0
      %v493 = vcombine.low %v404, %v412
      %v494 = vcombine.high %v404, %v412
      %v496 = vunpack.c.l.s4 1983009808
      %v497 = vunpack.c.0.s8 %v496
      %v498 = vlaneseq
      %v499 = vshrl.u32 %v498, 7
      %v500 = vsub.s32 %v497, %v499
      %v501 = vrot.slane %v493, %v500
      %v503 = vunpack.c.l.s4 1983009808
      %v504 = vunpack.c.0.s8 %v503
      %v505 = vlaneseq
      %v506 = vshrl.u32 %v505, 7
      %v507 = vsub.s32 %v504, %v506
      %v508 = vrot.slane %v494, %v507
      %v509 = vcombine.low %v408, %v416
      %v510 = vcombine.high %v408, %v416
      %v512 = vunpack.c.l.s4 1983009808
      %v513 = vunpack.c.0.s8 %v512
      %v514 = vlaneseq
      %v515 = vshrl.u32 %v514, 7
      %v516 = vsub.s32 %v513, %v515
      %v517 = vrot.slane %v509, %v516
      %v519 = vunpack.c.l.s4 1983009808
      %v520 = vunpack.c.0.s8 %v519
      %v521 = vlaneseq
      %v522 = vshrl.u32 %v521, 7
      %v523 = vsub.s32 %v520, %v522
      %v524 = vrot.slane %v510, %v523
      %v525 = vcombine.low %v501, %v517
      %v526 = vcombine.high %v501, %v517
      %v528 = vunpack.c.l.s4 1934713408
      %v529 = vunpack.c.0.s8 %v528
      %v530 = vlaneseq
      %v531 = vshrl.u32 %v530, 7
      %v532 = vsub.s32 %v529, %v531
      %v533 = vrot.slane %v525, %v532
      %v535 = vunpack.c.l.s4 1934713408
      %v536 = vunpack.c.0.s8 %v535
      %v537 = vlaneseq
      %v538 = vshrl.u32 %v537, 7
      %v539 = vsub.s32 %v536, %v538
      %v540 = vrot.slane %v526, %v539
      %v541 = vcombine.low %v508, %v524
      %v542 = vcombine.high %v508, %v524
      %v544 = vunpack.c.l.s4 1934713408
      %v545 = vunpack.c.0.s8 %v544
      %v546 = vlaneseq
      %v547 = vshrl.u32 %v546, 7
      %v548 = vsub.s32 %v545, %v547
      %v549 = vrot.slane %v541, %v548
      %v551 = vunpack.c.l.s4 1934713408
      %v552 = vunpack.c.0.s8 %v551
      %v553 = vlaneseq
      %v554 = vshrl.u32 %v553, 7
      %v555 = vsub.s32 %v552, %v554
      %v556 = vrot.slane %v542, %v555
      %v557 = vcombine.high %v533, 0.0
      %v558 = vcombine.high %v540, 0.0
      %v559 = vcombine.high %v549, 0.0
      %v560 = vcombine.high %v556, 0.0
      %562 = vrot.lane.b32.xlu0 %v489, 16
      %v563 = vpop.permute.xlu0 %562
      %566 = vrot.lane.b32.xlu0 %v472, 32
      %v567 = vpop.permute.xlu0 %566
      %570 = vrot.lane.b32.xlu0 %v490, 48
      %v571 = vpop.permute.xlu0 %570
      %574 = vrot.lane.b32.xlu0 %v481, 64
      %v575 = vpop.permute.xlu0 %574
      %578 = vrot.lane.b32.xlu0 %v491, 80
      %v579 = vpop.permute.xlu0 %578
      %582 = vrot.lane.b32.xlu0 %v488, 96
      %v583 = vpop.permute.xlu0 %582
      %586 = vrot.lane.b32.xlu0 %v492, 112
      %v587 = vpop.permute.xlu0 %586
      %590 = vrot.lane.b32.xlu0 %v557, 16
      %v591 = vpop.permute.xlu0 %590
      %594 = vrot.lane.b32.xlu0 %v540, 32
      %v595 = vpop.permute.xlu0 %594
      %598 = vrot.lane.b32.xlu0 %v558, 48
      %v599 = vpop.permute.xlu0 %598
      %602 = vrot.lane.b32.xlu0 %v549, 64
      %v603 = vpop.permute.xlu0 %602
      %606 = vrot.lane.b32.xlu0 %v559, 80
      %v607 = vpop.permute.xlu0 %606
      %610 = vrot.lane.b32.xlu0 %v556, 96
      %v611 = vpop.permute.xlu0 %610
      %614 = vrot.lane.b32.xlu0 %v560, 112
      %v615 = vpop.permute.xlu0 %614
      %v617 = vsel %vm372, %v465, %v563
      %v618 = vsel %vm374, %v617, %v567
      %v619 = vsel %vm376, %v618, %v571
      %v620 = vsel %vm378, %v619, %v575
      %v621 = vsel %vm380, %v620, %v579
      %v622 = vsel %vm382, %v621, %v583
      %v623 = vsel %vm384, %v622, %v587
      %v624 = vsel %vm372, %v533, %v591
      %v625 = vsel %vm374, %v624, %v595
      %v626 = vsel %vm376, %v625, %v599
      %v627 = vsel %vm378, %v626, %v603
      %v628 = vsel %vm380, %v627, %v607
      %v629 = vsel %vm382, %v628, %v611
      %v630 = vsel %vm384, %v629, %v615
      %631 = vrot.lane.b32.xlu0 %v172, 126
      %v632 = vpop.permute.xlu0 %631
      %633 = vrot.lane.b32.xlu0 %v173, 126
      %v634 = vpop.permute.xlu0 %633
      %635 = vrot.lane.b32.xlu0 %v174, 126
      %v636 = vpop.permute.xlu0 %635
      %637 = vrot.lane.b32.xlu0 %v175, 126
      %v638 = vpop.permute.xlu0 %637
      %639 = vrot.lane.b32.xlu0 %v176, 126
      %v640 = vpop.permute.xlu0 %639
      %641 = vrot.lane.b32.xlu0 %v177, 126
      %v642 = vpop.permute.xlu0 %641
      %643 = vrot.lane.b32.xlu0 %v178, 126
      %v644 = vpop.permute.xlu0 %643
      %645 = vrot.lane.b32.xlu0 %v179, 126
      %v646 = vpop.permute.xlu0 %645
      %v655 = vcombine.low %v632, %v640
      %v656 = vcombine.high %v632, %v640
      %v658 = vunpack.c.l.s4 1983009808
      %v659 = vunpack.c.0.s8 %v658
      %v660 = vlaneseq
      %v661 = vshrl.u32 %v660, 7
      %v662 = vsub.s32 %v659, %v661
      %v663 = vrot.slane %v655, %v662
      %v665 = vunpack.c.l.s4 1983009808
      %v666 = vunpack.c.0.s8 %v665
      %v667 = vlaneseq
      %v668 = vshrl.u32 %v667, 7
      %v669 = vsub.s32 %v666, %v668
      %v670 = vrot.slane %v656, %v669
      %v671 = vcombine.low %v636, %v644
      %v672 = vcombine.high %v636, %v644
      %v674 = vunpack.c.l.s4 1983009808
      %v675 = vunpack.c.0.s8 %v674
      %v676 = vlaneseq
      %v677 = vshrl.u32 %v676, 7
      %v678 = vsub.s32 %v675, %v677
      %v679 = vrot.slane %v671, %v678
      %v681 = vunpack.c.l.s4 1983009808
      %v682 = vunpack.c.0.s8 %v681
      %v683 = vlaneseq
      %v684 = vshrl.u32 %v683, 7
      %v685 = vsub.s32 %v682, %v684
      %v686 = vrot.slane %v672, %v685
      %v687 = vcombine.low %v663, %v679
      %v688 = vcombine.high %v663, %v679
      %v690 = vunpack.c.l.s4 1934713408
      %v691 = vunpack.c.0.s8 %v690
      %v692 = vlaneseq
      %v693 = vshrl.u32 %v692, 7
      %v694 = vsub.s32 %v691, %v693
      %v695 = vrot.slane %v687, %v694
      %v697 = vunpack.c.l.s4 1934713408
      %v698 = vunpack.c.0.s8 %v697
      %v699 = vlaneseq
      %v700 = vshrl.u32 %v699, 7
      %v701 = vsub.s32 %v698, %v700
      %v702 = vrot.slane %v688, %v701
      %v703 = vcombine.low %v670, %v686
      %v704 = vcombine.high %v670, %v686
      %v706 = vunpack.c.l.s4 1934713408
      %v707 = vunpack.c.0.s8 %v706
      %v708 = vlaneseq
      %v709 = vshrl.u32 %v708, 7
      %v710 = vsub.s32 %v707, %v709
      %v711 = vrot.slane %v703, %v710
      %v713 = vunpack.c.l.s4 1934713408
      %v714 = vunpack.c.0.s8 %v713
      %v715 = vlaneseq
      %v716 = vshrl.u32 %v715, 7
      %v717 = vsub.s32 %v714, %v716
      %v718 = vrot.slane %v704, %v717
      %v719 = vcombine.high %v695, 0.0
      %v720 = vcombine.high %v702, 0.0
      %v721 = vcombine.high %v711, 0.0
      %v722 = vcombine.high %v718, 0.0
      %v723 = vcombine.low %v634, %v642
      %v724 = vcombine.high %v634, %v642
      %v726 = vunpack.c.l.s4 1983009808
      %v727 = vunpack.c.0.s8 %v726
      %v728 = vlaneseq
      %v729 = vshrl.u32 %v728, 7
      %v730 = vsub.s32 %v727, %v729
      %v731 = vrot.slane %v723, %v730
      %v733 = vunpack.c.l.s4 1983009808
      %v734 = vunpack.c.0.s8 %v733
      %v735 = vlaneseq
      %v736 = vshrl.u32 %v735, 7
      %v737 = vsub.s32 %v734, %v736
      %v738 = vrot.slane %v724, %v737
      %v739 = vcombine.low %v638, %v646
      %v740 = vcombine.high %v638, %v646
      %v742 = vunpack.c.l.s4 1983009808
      %v743 = vunpack.c.0.s8 %v742
      %v744 = vlaneseq
      %v745 = vshrl.u32 %v744, 7
      %v746 = vsub.s32 %v743, %v745
      %v747 = vrot.slane %v739, %v746
      %v749 = vunpack.c.l.s4 1983009808
      %v750 = vunpack.c.0.s8 %v749
      %v751 = vlaneseq
      %v752 = vshrl.u32 %v751, 7
      %v753 = vsub.s32 %v750, %v752
      %v754 = vrot.slane %v740, %v753
      %v755 = vcombine.low %v731, %v747
      %v756 = vcombine.high %v731, %v747
      %v758 = vunpack.c.l.s4 1934713408
      %v759 = vunpack.c.0.s8 %v758
      %v760 = vlaneseq
      %v761 = vshrl.u32 %v760, 7
      %v762 = vsub.s32 %v759, %v761
      %v763 = vrot.slane %v755, %v762
      %v765 = vunpack.c.l.s4 1934713408
      %v766 = vunpack.c.0.s8 %v765
      %v767 = vlaneseq
      %v768 = vshrl.u32 %v767, 7
      %v769 = vsub.s32 %v766, %v768
      %v770 = vrot.slane %v756, %v769
      %v771 = vcombine.low %v738, %v754
      %v772 = vcombine.high %v738, %v754
      %v774 = vunpack.c.l.s4 1934713408
      %v775 = vunpack.c.0.s8 %v774
      %v776 = vlaneseq
      %v777 = vshrl.u32 %v776, 7
      %v778 = vsub.s32 %v775, %v777
      %v779 = vrot.slane %v771, %v778
      %v781 = vunpack.c.l.s4 1934713408
      %v782 = vunpack.c.0.s8 %v781
      %v783 = vlaneseq
      %v784 = vshrl.u32 %v783, 7
      %v785 = vsub.s32 %v782, %v784
      %v786 = vrot.slane %v772, %v785
      %v787 = vcombine.high %v763, 0.0
      %v788 = vcombine.high %v770, 0.0
      %v789 = vcombine.high %v779, 0.0
      %v790 = vcombine.high %v786, 0.0
      %792 = vrot.lane.b32.xlu0 %v719, 16
      %v793 = vpop.permute.xlu0 %792
      %796 = vrot.lane.b32.xlu0 %v702, 32
      %v797 = vpop.permute.xlu0 %796
      %800 = vrot.lane.b32.xlu0 %v720, 48
      %v801 = vpop.permute.xlu0 %800
      %804 = vrot.lane.b32.xlu0 %v711, 64
      %v805 = vpop.permute.xlu0 %804
      %808 = vrot.lane.b32.xlu0 %v721, 80
      %v809 = vpop.permute.xlu0 %808
      %812 = vrot.lane.b32.xlu0 %v718, 96
      %v813 = vpop.permute.xlu0 %812
      %816 = vrot.lane.b32.xlu0 %v722, 112
      %v817 = vpop.permute.xlu0 %816
      %820 = vrot.lane.b32.xlu0 %v787, 16
      %v821 = vpop.permute.xlu0 %820
      %824 = vrot.lane.b32.xlu0 %v770, 32
      %v825 = vpop.permute.xlu0 %824
      %828 = vrot.lane.b32.xlu0 %v788, 48
      %v829 = vpop.permute.xlu0 %828
      %832 = vrot.lane.b32.xlu0 %v779, 64
      %v833 = vpop.permute.xlu0 %832
      %836 = vrot.lane.b32.xlu0 %v789, 80
      %v837 = vpop.permute.xlu0 %836
      %840 = vrot.lane.b32.xlu0 %v786, 96
      %v841 = vpop.permute.xlu0 %840
      %844 = vrot.lane.b32.xlu0 %v790, 112
      %v845 = vpop.permute.xlu0 %844
      %v847 = vsel %vm372, %v695, %v793
      %v848 = vsel %vm374, %v847, %v797
      %v849 = vsel %vm376, %v848, %v801
      %v850 = vsel %vm378, %v849, %v805
      %v851 = vsel %vm380, %v850, %v809
      %v852 = vsel %vm382, %v851, %v813
      %v853 = vsel %vm384, %v852, %v817
      %v854 = vsel %vm372, %v763, %v821
      %v855 = vsel %vm374, %v854, %v825
      %v856 = vsel %vm376, %v855, %v829
      %v857 = vsel %vm378, %v856, %v833
      %v858 = vsel %vm380, %v857, %v837
      %v859 = vsel %vm382, %v858, %v841
      %v860 = vsel %vm384, %v859, %v845
      %v861 = vld [vmem:[%s165 + $0x1] sm:$0xff]
      %v862 = vld [vmem:[%s165 + $0x9] sm:$0xff]
      %v863 = vld [vmem:[%s165 + $0x19] sm:$0xff]
      %v864 = vld [vmem:[%s165 + $0x21] sm:$0xff]
      %v865 = vld [vmem:[%s165 + $0x31] sm:$0xff]
      %v866 = vld [vmem:[%s165 + $0x39] sm:$0xff]
      %v867 = vld [vmem:[%s165 + $0x49] sm:$0xff]
      %v868 = vld [vmem:[%s165 + $0x51] sm:$0xff]
      %v869 = vcombine.low %v861, %v865
      %v870 = vcombine.high %v861, %v865
      %v872 = vunpack.c.l.s4 1983009808
      %v873 = vunpack.c.0.s8 %v872
      %v874 = vlaneseq
      %v875 = vshrl.u32 %v874, 7
      %v876 = vsub.s32 %v873, %v875
      %v877 = vrot.slane %v869, %v876
      %v879 = vunpack.c.l.s4 1983009808
      %v880 = vunpack.c.0.s8 %v879
      %v881 = vlaneseq
      %v882 = vshrl.u32 %v881, 7
      %v883 = vsub.s32 %v880, %v882
      %v884 = vrot.slane %v870, %v883
      %v885 = vcombine.low %v863, %v867
      %v886 = vcombine.high %v863, %v867
      %v888 = vunpack.c.l.s4 1983009808
      %v889 = vunpack.c.0.s8 %v888
      %v890 = vlaneseq
      %v891 = vshrl.u32 %v890, 7
      %v892 = vsub.s32 %v889, %v891
      %v893 = vrot.slane %v885, %v892
      %v895 = vunpack.c.l.s4 1983009808
      %v896 = vunpack.c.0.s8 %v895
      %v897 = vlaneseq
      %v898 = vshrl.u32 %v897, 7
      %v899 = vsub.s32 %v896, %v898
      %v900 = vrot.slane %v886, %v899
      %v901 = vcombine.low %v877, %v893
      %v902 = vcombine.high %v877, %v893
      %v904 = vunpack.c.l.s4 1934713408
      %v905 = vunpack.c.0.s8 %v904
      %v906 = vlaneseq
      %v907 = vshrl.u32 %v906, 7
      %v908 = vsub.s32 %v905, %v907
      %v909 = vrot.slane %v901, %v908
      %v911 = vunpack.c.l.s4 1934713408
      %v912 = vunpack.c.0.s8 %v911
      %v913 = vlaneseq
      %v914 = vshrl.u32 %v913, 7
      %v915 = vsub.s32 %v912, %v914
      %v916 = vrot.slane %v902, %v915
      %v917 = vcombine.low %v884, %v900
      %v918 = vcombine.high %v884, %v900
      %v920 = vunpack.c.l.s4 1934713408
      %v921 = vunpack.c.0.s8 %v920
      %v922 = vlaneseq
      %v923 = vshrl.u32 %v922, 7
      %v924 = vsub.s32 %v921, %v923
      %v925 = vrot.slane %v917, %v924
      %v927 = vunpack.c.l.s4 1934713408
      %v928 = vunpack.c.0.s8 %v927
      %v929 = vlaneseq
      %v930 = vshrl.u32 %v929, 7
      %v931 = vsub.s32 %v928, %v930
      %v932 = vrot.slane %v918, %v931
      %v933 = vcombine.high %v909, 0.0
      %v934 = vcombine.high %v916, 0.0
      %v935 = vcombine.high %v925, 0.0
      %v936 = vcombine.high %v932, 0.0
      %v937 = vcombine.low %v862, %v866
      %v938 = vcombine.high %v862, %v866
      %v940 = vunpack.c.l.s4 1983009808
      %v941 = vunpack.c.0.s8 %v940
      %v942 = vlaneseq
      %v943 = vshrl.u32 %v942, 7
      %v944 = vsub.s32 %v941, %v943
      %v945 = vrot.slane %v937, %v944
      %v947 = vunpack.c.l.s4 1983009808
      %v948 = vunpack.c.0.s8 %v947
      %v949 = vlaneseq
      %v950 = vshrl.u32 %v949, 7
      %v951 = vsub.s32 %v948, %v950
      %v952 = vrot.slane %v938, %v951
      %v953 = vcombine.low %v864, %v868
      %v954 = vcombine.high %v864, %v868
      %v956 = vunpack.c.l.s4 1983009808
      %v957 = vunpack.c.0.s8 %v956
      %v958 = vlaneseq
      %v959 = vshrl.u32 %v958, 7
      %v960 = vsub.s32 %v957, %v959
      %v961 = vrot.slane %v953, %v960
      %v963 = vunpack.c.l.s4 1983009808
      %v964 = vunpack.c.0.s8 %v963
      %v965 = vlaneseq
      %v966 = vshrl.u32 %v965, 7
      %v967 = vsub.s32 %v964, %v966
      %v968 = vrot.slane %v954, %v967
      %v969 = vcombine.low %v945, %v961
      %v970 = vcombine.high %v945, %v961
      %v972 = vunpack.c.l.s4 1934713408
      %v973 = vunpack.c.0.s8 %v972
      %v974 = vlaneseq
      %v975 = vshrl.u32 %v974, 7
      %v976 = vsub.s32 %v973, %v975
      %v977 = vrot.slane %v969, %v976
      %v979 = vunpack.c.l.s4 1934713408
      %v980 = vunpack.c.0.s8 %v979
      %v981 = vlaneseq
      %v982 = vshrl.u32 %v981, 7
      %v983 = vsub.s32 %v980, %v982
      %v984 = vrot.slane %v970, %v983
      %v985 = vcombine.low %v952, %v968
      %v986 = vcombine.high %v952, %v968
      %v988 = vunpack.c.l.s4 1934713408
      %v989 = vunpack.c.0.s8 %v988
      %v990 = vlaneseq
      %v991 = vshrl.u32 %v990, 7
      %v992 = vsub.s32 %v989, %v991
      %v993 = vrot.slane %v985, %v992
      %v995 = vunpack.c.l.s4 1934713408
      %v996 = vunpack.c.0.s8 %v995
      %v997 = vlaneseq
      %v998 = vshrl.u32 %v997, 7
      %v999 = vsub.s32 %v996, %v998
      %v1000 = vrot.slane %v986, %v999
      %v1001 = vcombine.high %v977, 0.0
      %v1002 = vcombine.high %v984, 0.0
      %v1003 = vcombine.high %v993, 0.0
      %v1004 = vcombine.high %v1000, 0.0
      %1006 = vrot.lane.b32.xlu0 %v933, 16
      %v1007 = vpop.permute.xlu0 %1006
      %1010 = vrot.lane.b32.xlu0 %v916, 32
      %v1011 = vpop.permute.xlu0 %1010
      %1014 = vrot.lane.b32.xlu0 %v934, 48
      %v1015 = vpop.permute.xlu0 %1014
      %1018 = vrot.lane.b32.xlu0 %v925, 64
      %v1019 = vpop.permute.xlu0 %1018
      %1022 = vrot.lane.b32.xlu0 %v935, 80
      %v1023 = vpop.permute.xlu0 %1022
      %1026 = vrot.lane.b32.xlu0 %v932, 96
      %v1027 = vpop.permute.xlu0 %1026
      %1030 = vrot.lane.b32.xlu0 %v936, 112
      %v1031 = vpop.permute.xlu0 %1030
      %1034 = vrot.lane.b32.xlu0 %v1001, 16
      %v1035 = vpop.permute.xlu0 %1034
      %1038 = vrot.lane.b32.xlu0 %v984, 32
      %v1039 = vpop.permute.xlu0 %1038
      %1042 = vrot.lane.b32.xlu0 %v1002, 48
      %v1043 = vpop.permute.xlu0 %1042
      %1046 = vrot.lane.b32.xlu0 %v993, 64
      %v1047 = vpop.permute.xlu0 %1046
      %1050 = vrot.lane.b32.xlu0 %v1003, 80
      %v1051 = vpop.permute.xlu0 %1050
      %1054 = vrot.lane.b32.xlu0 %v1000, 96
      %v1055 = vpop.permute.xlu0 %1054
      %1058 = vrot.lane.b32.xlu0 %v1004, 112
      %v1059 = vpop.permute.xlu0 %1058
      %v1061 = vsel %vm372, %v909, %v1007
      %v1062 = vsel %vm374, %v1061, %v1011
      %v1063 = vsel %vm376, %v1062, %v1015
      %v1064 = vsel %vm378, %v1063, %v1019
      %v1065 = vsel %vm380, %v1064, %v1023
      %v1066 = vsel %vm382, %v1065, %v1027
      %v1067 = vsel %vm384, %v1066, %v1031
      %v1068 = vsel %vm372, %v977, %v1035
      %v1069 = vsel %vm374, %v1068, %v1039
      %v1070 = vsel %vm376, %v1069, %v1043
      %v1071 = vsel %vm378, %v1070, %v1047
      %v1072 = vsel %vm380, %v1071, %v1051
      %v1073 = vsel %vm382, %v1072, %v1055
      %v1074 = vsel %vm384, %v1073, %v1059
      %1083 = vrot.lane.b32.xlu0 %v861, 127
      %v1084 = vpop.permute.xlu0 %1083
      %1085 = vrot.lane.b32.xlu0 %v862, 127
      %v1086 = vpop.permute.xlu0 %1085
      %1087 = vrot.lane.b32.xlu0 %v863, 127
      %v1088 = vpop.permute.xlu0 %1087
      %1089 = vrot.lane.b32.xlu0 %v864, 127
      %v1090 = vpop.permute.xlu0 %1089
      %1091 = vrot.lane.b32.xlu0 %v865, 127
      %v1092 = vpop.permute.xlu0 %1091
      %1093 = vrot.lane.b32.xlu0 %v866, 127
      %v1094 = vpop.permute.xlu0 %1093
      %1095 = vrot.lane.b32.xlu0 %v867, 127
      %v1096 = vpop.permute.xlu0 %1095
      %1097 = vrot.lane.b32.xlu0 %v868, 127
      %v1098 = vpop.permute.xlu0 %1097
      %v1107 = vcombine.low %v1084, %v1092
      %v1108 = vcombine.high %v1084, %v1092
      %v1110 = vunpack.c.l.s4 1983009808
      %v1111 = vunpack.c.0.s8 %v1110
      %v1112 = vlaneseq
      %v1113 = vshrl.u32 %v1112, 7
      %v1114 = vsub.s32 %v1111, %v1113
      %v1115 = vrot.slane %v1107, %v1114
      %v1117 = vunpack.c.l.s4 1983009808
      %v1118 = vunpack.c.0.s8 %v1117
      %v1119 = vlaneseq
      %v1120 = vshrl.u32 %v1119, 7
      %v1121 = vsub.s32 %v1118, %v1120
      %v1122 = vrot.slane %v1108, %v1121
      %v1123 = vcombine.low %v1088, %v1096
      %v1124 = vcombine.high %v1088, %v1096
      %v1126 = vunpack.c.l.s4 1983009808
      %v1127 = vunpack.c.0.s8 %v1126
      %v1128 = vlaneseq
      %v1129 = vshrl.u32 %v1128, 7
      %v1130 = vsub.s32 %v1127, %v1129
      %v1131 = vrot.slane %v1123, %v1130
      %v1133 = vunpack.c.l.s4 1983009808
      %v1134 = vunpack.c.0.s8 %v1133
      %v1135 = vlaneseq
      %v1136 = vshrl.u32 %v1135, 7
      %v1137 = vsub.s32 %v1134, %v1136
      %v1138 = vrot.slane %v1124, %v1137
      %v1139 = vcombine.low %v1115, %v1131
      %v1140 = vcombine.high %v1115, %v1131
      %v1142 = vunpack.c.l.s4 1934713408
      %v1143 = vunpack.c.0.s8 %v1142
      %v1144 = vlaneseq
      %v1145 = vshrl.u32 %v1144, 7
      %v1146 = vsub.s32 %v1143, %v1145
      %v1147 = vrot.slane %v1139, %v1146
      %v1149 = vunpack.c.l.s4 1934713408
      %v1150 = vunpack.c.0.s8 %v1149
      %v1151 = vlaneseq
      %v1152 = vshrl.u32 %v1151, 7
      %v1153 = vsub.s32 %v1150, %v1152
      %v1154 = vrot.slane %v1140, %v1153
      %v1155 = vcombine.low %v1122, %v1138
      %v1156 = vcombine.high %v1122, %v1138
      %v1158 = vunpack.c.l.s4 1934713408
      %v1159 = vunpack.c.0.s8 %v1158
      %v1160 = vlaneseq
      %v1161 = vshrl.u32 %v1160, 7
      %v1162 = vsub.s32 %v1159, %v1161
      %v1163 = vrot.slane %v1155, %v1162
      %v1165 = vunpack.c.l.s4 1934713408
      %v1166 = vunpack.c.0.s8 %v1165
      %v1167 = vlaneseq
      %v1168 = vshrl.u32 %v1167, 7
      %v1169 = vsub.s32 %v1166, %v1168
      %v1170 = vrot.slane %v1156, %v1169
      %v1171 = vcombine.high %v1147, 0.0
      %v1172 = vcombine.high %v1154, 0.0
      %v1173 = vcombine.high %v1163, 0.0
      %v1174 = vcombine.high %v1170, 0.0
      %v1175 = vcombine.low %v1086, %v1094
      %v1176 = vcombine.high %v1086, %v1094
      %v1178 = vunpack.c.l.s4 1983009808
      %v1179 = vunpack.c.0.s8 %v1178
      %v1180 = vlaneseq
      %v1181 = vshrl.u32 %v1180, 7
      %v1182 = vsub.s32 %v1179, %v1181
      %v1183 = vrot.slane %v1175, %v1182
      %v1185 = vunpack.c.l.s4 1983009808
      %v1186 = vunpack.c.0.s8 %v1185
      %v1187 = vlaneseq
      %v1188 = vshrl.u32 %v1187, 7
      %v1189 = vsub.s32 %v1186, %v1188
      %v1190 = vrot.slane %v1176, %v1189
      %v1191 = vcombine.low %v1090, %v1098
      %v1192 = vcombine.high %v1090, %v1098
      %v1194 = vunpack.c.l.s4 1983009808
      %v1195 = vunpack.c.0.s8 %v1194
      %v1196 = vlaneseq
      %v1197 = vshrl.u32 %v1196, 7
      %v1198 = vsub.s32 %v1195, %v1197
      %v1199 = vrot.slane %v1191, %v1198
      %v1201 = vunpack.c.l.s4 1983009808
      %v1202 = vunpack.c.0.s8 %v1201
      %v1203 = vlaneseq
      %v1204 = vshrl.u32 %v1203, 7
      %v1205 = vsub.s32 %v1202, %v1204
      %v1206 = vrot.slane %v1192, %v1205
      %v1207 = vcombine.low %v1183, %v1199
      %v1208 = vcombine.high %v1183, %v1199
      %v1210 = vunpack.c.l.s4 1934713408
      %v1211 = vunpack.c.0.s8 %v1210
      %v1212 = vlaneseq
      %v1213 = vshrl.u32 %v1212, 7
      %v1214 = vsub.s32 %v1211, %v1213
      %v1215 = vrot.slane %v1207, %v1214
      %v1217 = vunpack.c.l.s4 1934713408
      %v1218 = vunpack.c.0.s8 %v1217
      %v1219 = vlaneseq
      %v1220 = vshrl.u32 %v1219, 7
      %v1221 = vsub.s32 %v1218, %v1220
      %v1222 = vrot.slane %v1208, %v1221
      %v1223 = vcombine.low %v1190, %v1206
      %v1224 = vcombine.high %v1190, %v1206
      %v1226 = vunpack.c.l.s4 1934713408
      %v1227 = vunpack.c.0.s8 %v1226
      %v1228 = vlaneseq
      %v1229 = vshrl.u32 %v1228, 7
      %v1230 = vsub.s32 %v1227, %v1229
      %v1231 = vrot.slane %v1223, %v1230
      %v1233 = vunpack.c.l.s4 1934713408
      %v1234 = vunpack.c.0.s8 %v1233
      %v1235 = vlaneseq
      %v1236 = vshrl.u32 %v1235, 7
      %v1237 = vsub.s32 %v1234, %v1236
      %v1238 = vrot.slane %v1224, %v1237
      %v1239 = vcombine.high %v1215, 0.0
      %v1240 = vcombine.high %v1222, 0.0
      %v1241 = vcombine.high %v1231, 0.0
      %v1242 = vcombine.high %v1238, 0.0
      %1244 = vrot.lane.b32.xlu0 %v1171, 16
      %v1245 = vpop.permute.xlu0 %1244
      %1248 = vrot.lane.b32.xlu0 %v1154, 32
      %v1249 = vpop.permute.xlu0 %1248
      %1252 = vrot.lane.b32.xlu0 %v1172, 48
      %v1253 = vpop.permute.xlu0 %1252
      %1256 = vrot.lane.b32.xlu0 %v1163, 64
      %v1257 = vpop.permute.xlu0 %1256
      %1260 = vrot.lane.b32.xlu0 %v1173, 80
      %v1261 = vpop.permute.xlu0 %1260
      %1264 = vrot.lane.b32.xlu0 %v1170, 96
      %v1265 = vpop.permute.xlu0 %1264
      %1268 = vrot.lane.b32.xlu0 %v1174, 112
      %v1269 = vpop.permute.xlu0 %1268
      %1272 = vrot.lane.b32.xlu0 %v1239, 16
      %v1273 = vpop.permute.xlu0 %1272
      %1276 = vrot.lane.b32.xlu0 %v1222, 32
      %v1277 = vpop.permute.xlu0 %1276
      %1280 = vrot.lane.b32.xlu0 %v1240, 48
      %v1281 = vpop.permute.xlu0 %1280
      %1284 = vrot.lane.b32.xlu0 %v1231, 64
      %v1285 = vpop.permute.xlu0 %1284
      %1288 = vrot.lane.b32.xlu0 %v1241, 80
      %v1289 = vpop.permute.xlu0 %1288
      %1292 = vrot.lane.b32.xlu0 %v1238, 96
      %v1293 = vpop.permute.xlu0 %1292
      %1296 = vrot.lane.b32.xlu0 %v1242, 112
      %v1297 = vpop.permute.xlu0 %1296
      %v1299 = vsel %vm372, %v1147, %v1245
      %v1300 = vsel %vm374, %v1299, %v1249
      %v1301 = vsel %vm376, %v1300, %v1253
      %v1302 = vsel %vm378, %v1301, %v1257
      %v1303 = vsel %vm380, %v1302, %v1261
      %v1304 = vsel %vm382, %v1303, %v1265
      %v1305 = vsel %vm384, %v1304, %v1269
      %v1306 = vsel %vm372, %v1215, %v1273
      %v1307 = vsel %vm374, %v1306, %v1277
      %v1308 = vsel %vm376, %v1307, %v1281
      %v1309 = vsel %vm378, %v1308, %v1285
      %v1310 = vsel %vm380, %v1309, %v1289
      %v1311 = vsel %vm382, %v1310, %v1293
      %v1312 = vsel %vm384, %v1311, %v1297
      %1313 = vrot.lane.b32.xlu0 %v861, 126
      %v1314 = vpop.permute.xlu0 %1313
      %1315 = vrot.lane.b32.xlu0 %v862, 126
      %v1316 = vpop.permute.xlu0 %1315
      %1317 = vrot.lane.b32.xlu0 %v863, 126
      %v1318 = vpop.permute.xlu0 %1317
      %1319 = vrot.lane.b32.xlu0 %v864, 126
      %v1320 = vpop.permute.xlu0 %1319
      %1321 = vrot.lane.b32.xlu0 %v865, 126
      %v1322 = vpop.permute.xlu0 %1321
      %1323 = vrot.lane.b32.xlu0 %v866, 126
      %v1324 = vpop.permute.xlu0 %1323
      %1325 = vrot.lane.b32.xlu0 %v867, 126
      %v1326 = vpop.permute.xlu0 %1325
      %1327 = vrot.lane.b32.xlu0 %v868, 126
      %v1328 = vpop.permute.xlu0 %1327
      %v1337 = vcombine.low %v1314, %v1322
      %v1338 = vcombine.high %v1314, %v1322
      %v1340 = vunpack.c.l.s4 1983009808
      %v1341 = vunpack.c.0.s8 %v1340
      %v1342 = vlaneseq
      %v1343 = vshrl.u32 %v1342, 7
      %v1344 = vsub.s32 %v1341, %v1343
      %v1345 = vrot.slane %v1337, %v1344
      %v1347 = vunpack.c.l.s4 1983009808
      %v1348 = vunpack.c.0.s8 %v1347
      %v1349 = vlaneseq
      %v1350 = vshrl.u32 %v1349, 7
      %v1351 = vsub.s32 %v1348, %v1350
      %v1352 = vrot.slane %v1338, %v1351
      %v1353 = vcombine.low %v1318, %v1326
      %v1354 = vcombine.high %v1318, %v1326
      %v1356 = vunpack.c.l.s4 1983009808
      %v1357 = vunpack.c.0.s8 %v1356
      %v1358 = vlaneseq
      %v1359 = vshrl.u32 %v1358, 7
      %v1360 = vsub.s32 %v1357, %v1359
      %v1361 = vrot.slane %v1353, %v1360
      %v1363 = vunpack.c.l.s4 1983009808
      %v1364 = vunpack.c.0.s8 %v1363
      %v1365 = vlaneseq
      %v1366 = vshrl.u32 %v1365, 7
      %v1367 = vsub.s32 %v1364, %v1366
      %v1368 = vrot.slane %v1354, %v1367
      %v1369 = vcombine.low %v1345, %v1361
      %v1370 = vcombine.high %v1345, %v1361
      %v1372 = vunpack.c.l.s4 1934713408
      %v1373 = vunpack.c.0.s8 %v1372
      %v1374 = vlaneseq
      %v1375 = vshrl.u32 %v1374, 7
      %v1376 = vsub.s32 %v1373, %v1375
      %v1377 = vrot.slane %v1369, %v1376
      %v1379 = vunpack.c.l.s4 1934713408
      %v1380 = vunpack.c.0.s8 %v1379
      %v1381 = vlaneseq
      %v1382 = vshrl.u32 %v1381, 7
      %v1383 = vsub.s32 %v1380, %v1382
      %v1384 = vrot.slane %v1370, %v1383
      %v1385 = vcombine.low %v1352, %v1368
      %v1386 = vcombine.high %v1352, %v1368
      %v1388 = vunpack.c.l.s4 1934713408
      %v1389 = vunpack.c.0.s8 %v1388
      %v1390 = vlaneseq
      %v1391 = vshrl.u32 %v1390, 7
      %v1392 = vsub.s32 %v1389, %v1391
      %v1393 = vrot.slane %v1385, %v1392
      %v1395 = vunpack.c.l.s4 1934713408
      %v1396 = vunpack.c.0.s8 %v1395
      %v1397 = vlaneseq
      %v1398 = vshrl.u32 %v1397, 7
      %v1399 = vsub.s32 %v1396, %v1398
      %v1400 = vrot.slane %v1386, %v1399
      %v1401 = vcombine.high %v1377, 0.0
      %v1402 = vcombine.high %v1384, 0.0
      %v1403 = vcombine.high %v1393, 0.0
      %v1404 = vcombine.high %v1400, 0.0
      %v1405 = vcombine.low %v1316, %v1324
      %v1406 = vcombine.high %v1316, %v1324
      %v1408 = vunpack.c.l.s4 1983009808
      %v1409 = vunpack.c.0.s8 %v1408
      %v1410 = vlaneseq
      %v1411 = vshrl.u32 %v1410, 7
      %v1412 = vsub.s32 %v1409, %v1411
      %v1413 = vrot.slane %v1405, %v1412
      %v1415 = vunpack.c.l.s4 1983009808
      %v1416 = vunpack.c.0.s8 %v1415
      %v1417 = vlaneseq
      %v1418 = vshrl.u32 %v1417, 7
      %v1419 = vsub.s32 %v1416, %v1418
      %v1420 = vrot.slane %v1406, %v1419
      %v1421 = vcombine.low %v1320, %v1328
      %v1422 = vcombine.high %v1320, %v1328
      %v1424 = vunpack.c.l.s4 1983009808
      %v1425 = vunpack.c.0.s8 %v1424
      %v1426 = vlaneseq
      %v1427 = vshrl.u32 %v1426, 7
      %v1428 = vsub.s32 %v1425, %v1427
      %v1429 = vrot.slane %v1421, %v1428
      %v1431 = vunpack.c.l.s4 1983009808
      %v1432 = vunpack.c.0.s8 %v1431
      %v1433 = vlaneseq
      %v1434 = vshrl.u32 %v1433, 7
      %v1435 = vsub.s32 %v1432, %v1434
      %v1436 = vrot.slane %v1422, %v1435
      %v1437 = vcombine.low %v1413, %v1429
      %v1438 = vcombine.high %v1413, %v1429
      %v1440 = vunpack.c.l.s4 1934713408
      %v1441 = vunpack.c.0.s8 %v1440
      %v1442 = vlaneseq
      %v1443 = vshrl.u32 %v1442, 7
      %v1444 = vsub.s32 %v1441, %v1443
      %v1445 = vrot.slane %v1437, %v1444
      %v1447 = vunpack.c.l.s4 1934713408
      %v1448 = vunpack.c.0.s8 %v1447
      %v1449 = vlaneseq
      %v1450 = vshrl.u32 %v1449, 7
      %v1451 = vsub.s32 %v1448, %v1450
      %v1452 = vrot.slane %v1438, %v1451
      %v1453 = vcombine.low %v1420, %v1436
      %v1454 = vcombine.high %v1420, %v1436
      %v1456 = vunpack.c.l.s4 1934713408
      %v1457 = vunpack.c.0.s8 %v1456
      %v1458 = vlaneseq
      %v1459 = vshrl.u32 %v1458, 7
      %v1460 = vsub.s32 %v1457, %v1459
      %v1461 = vrot.slane %v1453, %v1460
      %v1463 = vunpack.c.l.s4 1934713408
      %v1464 = vunpack.c.0.s8 %v1463
      %v1465 = vlaneseq
      %v1466 = vshrl.u32 %v1465, 7
      %v1467 = vsub.s32 %v1464, %v1466
      %v1468 = vrot.slane %v1454, %v1467
      %v1469 = vcombine.high %v1445, 0.0
      %v1470 = vcombine.high %v1452, 0.0
      %v1471 = vcombine.high %v1461, 0.0
      %v1472 = vcombine.high %v1468, 0.0
      %1474 = vrot.lane.b32.xlu0 %v1401, 16
      %v1475 = vpop.permute.xlu0 %1474
      %1478 = vrot.lane.b32.xlu0 %v1384, 32
      %v1479 = vpop.permute.xlu0 %1478
      %1482 = vrot.lane.b32.xlu0 %v1402, 48
      %v1483 = vpop.permute.xlu0 %1482
      %1486 = vrot.lane.b32.xlu0 %v1393, 64
      %v1487 = vpop.permute.xlu0 %1486
      %1490 = vrot.lane.b32.xlu0 %v1403, 80
      %v1491 = vpop.permute.xlu0 %1490
      %1494 = vrot.lane.b32.xlu0 %v1400, 96
      %v1495 = vpop.permute.xlu0 %1494
      %1498 = vrot.lane.b32.xlu0 %v1404, 112
      %v1499 = vpop.permute.xlu0 %1498
      %1502 = vrot.lane.b32.xlu0 %v1469, 16
      %v1503 = vpop.permute.xlu0 %1502
      %1506 = vrot.lane.b32.xlu0 %v1452, 32
      %v1507 = vpop.permute.xlu0 %1506
      %1510 = vrot.lane.b32.xlu0 %v1470, 48
      %v1511 = vpop.permute.xlu0 %1510
      %1514 = vrot.lane.b32.xlu0 %v1461, 64
      %v1515 = vpop.permute.xlu0 %1514
      %1518 = vrot.lane.b32.xlu0 %v1471, 80
      %v1519 = vpop.permute.xlu0 %1518
      %1522 = vrot.lane.b32.xlu0 %v1468, 96
      %v1523 = vpop.permute.xlu0 %1522
      %1526 = vrot.lane.b32.xlu0 %v1472, 112
      %v1527 = vpop.permute.xlu0 %1526
      %v1529 = vsel %vm372, %v1377, %v1475
      %v1530 = vsel %vm374, %v1529, %v1479
      %v1531 = vsel %vm376, %v1530, %v1483
      %v1532 = vsel %vm378, %v1531, %v1487
      %v1533 = vsel %vm380, %v1532, %v1491
      %v1534 = vsel %vm382, %v1533, %v1495
      %v1535 = vsel %vm384, %v1534, %v1499
      %v1536 = vsel %vm372, %v1445, %v1503
      %v1537 = vsel %vm374, %v1536, %v1507
      %v1538 = vsel %vm376, %v1537, %v1511
      %v1539 = vsel %vm378, %v1538, %v1515
      %v1540 = vsel %vm380, %v1539, %v1519
      %v1541 = vsel %vm382, %v1540, %v1523
      %v1542 = vsel %vm384, %v1541, %v1527
      %v1543 = vld [vmem:[%s165 + $0x2] sm:$0xff]
      %v1544 = vld [vmem:[%s165 + $0xa] sm:$0xff]
      %v1545 = vld [vmem:[%s165 + $0x1a] sm:$0xff]
      %v1546 = vld [vmem:[%s165 + $0x22] sm:$0xff]
      %v1547 = vld [vmem:[%s165 + $0x32] sm:$0xff]
      %v1548 = vld [vmem:[%s165 + $0x3a] sm:$0xff]
      %v1549 = vld [vmem:[%s165 + $0x4a] sm:$0xff]
      %v1550 = vld [vmem:[%s165 + $0x52] sm:$0xff]
      %v1551 = vcombine.low %v1543, %v1547
      %v1552 = vcombine.high %v1543, %v1547
      %v1554 = vunpack.c.l.s4 1983009808
      %v1555 = vunpack.c.0.s8 %v1554
      %v1556 = vlaneseq
      %v1557 = vshrl.u32 %v1556, 7
      %v1558 = vsub.s32 %v1555, %v1557
      %v1559 = vrot.slane %v1551, %v1558
      %v1561 = vunpack.c.l.s4 1983009808
      %v1562 = vunpack.c.0.s8 %v1561
      %v1563 = vlaneseq
      %v1564 = vshrl.u32 %v1563, 7
      %v1565 = vsub.s32 %v1562, %v1564
      %v1566 = vrot.slane %v1552, %v1565
      %v1567 = vcombine.low %v1545, %v1549
      %v1568 = vcombine.high %v1545, %v1549
      %v1570 = vunpack.c.l.s4 1983009808
      %v1571 = vunpack.c.0.s8 %v1570
      %v1572 = vlaneseq
      %v1573 = vshrl.u32 %v1572, 7
      %v1574 = vsub.s32 %v1571, %v1573
      %v1575 = vrot.slane %v1567, %v1574
      %v1577 = vunpack.c.l.s4 1983009808
      %v1578 = vunpack.c.0.s8 %v1577
      %v1579 = vlaneseq
      %v1580 = vshrl.u32 %v1579, 7
      %v1581 = vsub.s32 %v1578, %v1580
      %v1582 = vrot.slane %v1568, %v1581
      %v1583 = vcombine.low %v1559, %v1575
      %v1584 = vcombine.high %v1559, %v1575
      %v1586 = vunpack.c.l.s4 1934713408
      %v1587 = vunpack.c.0.s8 %v1586
      %v1588 = vlaneseq
      %v1589 = vshrl.u32 %v1588, 7
      %v1590 = vsub.s32 %v1587, %v1589
      %v1591 = vrot.slane %v1583, %v1590
      %v1593 = vunpack.c.l.s4 1934713408
      %v1594 = vunpack.c.0.s8 %v1593
      %v1595 = vlaneseq
      %v1596 = vshrl.u32 %v1595, 7
      %v1597 = vsub.s32 %v1594, %v1596
      %v1598 = vrot.slane %v1584, %v1597
      %v1599 = vcombine.low %v1566, %v1582
      %v1600 = vcombine.high %v1566, %v1582
      %v1602 = vunpack.c.l.s4 1934713408
      %v1603 = vunpack.c.0.s8 %v1602
      %v1604 = vlaneseq
      %v1605 = vshrl.u32 %v1604, 7
      %v1606 = vsub.s32 %v1603, %v1605
      %v1607 = vrot.slane %v1599, %v1606
      %v1609 = vunpack.c.l.s4 1934713408
      %v1610 = vunpack.c.0.s8 %v1609
      %v1611 = vlaneseq
      %v1612 = vshrl.u32 %v1611, 7
      %v1613 = vsub.s32 %v1610, %v1612
      %v1614 = vrot.slane %v1600, %v1613
      %v1615 = vcombine.high %v1591, 0.0
      %v1616 = vcombine.high %v1598, 0.0
      %v1617 = vcombine.high %v1607, 0.0
      %v1618 = vcombine.high %v1614, 0.0
      %v1619 = vcombine.low %v1544, %v1548
      %v1620 = vcombine.high %v1544, %v1548
      %v1622 = vunpack.c.l.s4 1983009808
      %v1623 = vunpack.c.0.s8 %v1622
      %v1624 = vlaneseq
      %v1625 = vshrl.u32 %v1624, 7
      %v1626 = vsub.s32 %v1623, %v1625
      %v1627 = vrot.slane %v1619, %v1626
      %v1629 = vunpack.c.l.s4 1983009808
      %v1630 = vunpack.c.0.s8 %v1629
      %v1631 = vlaneseq
      %v1632 = vshrl.u32 %v1631, 7
      %v1633 = vsub.s32 %v1630, %v1632
      %v1634 = vrot.slane %v1620, %v1633
      %v1635 = vcombine.low %v1546, %v1550
      %v1636 = vcombine.high %v1546, %v1550
      %v1638 = vunpack.c.l.s4 1983009808
      %v1639 = vunpack.c.0.s8 %v1638
      %v1640 = vlaneseq
      %v1641 = vshrl.u32 %v1640, 7
      %v1642 = vsub.s32 %v1639, %v1641
      %v1643 = vrot.slane %v1635, %v1642
      %v1645 = vunpack.c.l.s4 1983009808
      %v1646 = vunpack.c.0.s8 %v1645
      %v1647 = vlaneseq
      %v1648 = vshrl.u32 %v1647, 7
      %v1649 = vsub.s32 %v1646, %v1648
      %v1650 = vrot.slane %v1636, %v1649
      %v1651 = vcombine.low %v1627, %v1643
      %v1652 = vcombine.high %v1627, %v1643
      %v1654 = vunpack.c.l.s4 1934713408
      %v1655 = vunpack.c.0.s8 %v1654
      %v1656 = vlaneseq
      %v1657 = vshrl.u32 %v1656, 7
      %v1658 = vsub.s32 %v1655, %v1657
      %v1659 = vrot.slane %v1651, %v1658
      %v1661 = vunpack.c.l.s4 1934713408
      %v1662 = vunpack.c.0.s8 %v1661
      %v1663 = vlaneseq
      %v1664 = vshrl.u32 %v1663, 7
      %v1665 = vsub.s32 %v1662, %v1664
      %v1666 = vrot.slane %v1652, %v1665
      %v1667 = vcombine.low %v1634, %v1650
      %v1668 = vcombine.high %v1634, %v1650
      %v1670 = vunpack.c.l.s4 1934713408
      %v1671 = vunpack.c.0.s8 %v1670
      %v1672 = vlaneseq
      %v1673 = vshrl.u32 %v1672, 7
      %v1674 = vsub.s32 %v1671, %v1673
      %v1675 = vrot.slane %v1667, %v1674
      %v1677 = vunpack.c.l.s4 1934713408
      %v1678 = vunpack.c.0.s8 %v1677
      %v1679 = vlaneseq
      %v1680 = vshrl.u32 %v1679, 7
      %v1681 = vsub.s32 %v1678, %v1680
      %v1682 = vrot.slane %v1668, %v1681
      %v1683 = vcombine.high %v1659, 0.0
      %v1684 = vcombine.high %v1666, 0.0
      %v1685 = vcombine.high %v1675, 0.0
      %v1686 = vcombine.high %v1682, 0.0
      %1688 = vrot.lane.b32.xlu0 %v1615, 16
      %v1689 = vpop.permute.xlu0 %1688
      %1692 = vrot.lane.b32.xlu0 %v1598, 32
      %v1693 = vpop.permute.xlu0 %1692
      %1696 = vrot.lane.b32.xlu0 %v1616, 48
      %v1697 = vpop.permute.xlu0 %1696
      %1700 = vrot.lane.b32.xlu0 %v1607, 64
      %v1701 = vpop.permute.xlu0 %1700
      %1704 = vrot.lane.b32.xlu0 %v1617, 80
      %v1705 = vpop.permute.xlu0 %1704
      %1708 = vrot.lane.b32.xlu0 %v1614, 96
      %v1709 = vpop.permute.xlu0 %1708
      %1712 = vrot.lane.b32.xlu0 %v1618, 112
      %v1713 = vpop.permute.xlu0 %1712
      %1716 = vrot.lane.b32.xlu0 %v1683, 16
      %v1717 = vpop.permute.xlu0 %1716
      %1720 = vrot.lane.b32.xlu0 %v1666, 32
      %v1721 = vpop.permute.xlu0 %1720
      %1724 = vrot.lane.b32.xlu0 %v1684, 48
      %v1725 = vpop.permute.xlu0 %1724
      %1728 = vrot.lane.b32.xlu0 %v1675, 64
      %v1729 = vpop.permute.xlu0 %1728
      %1732 = vrot.lane.b32.xlu0 %v1685, 80
      %v1733 = vpop.permute.xlu0 %1732
      %1736 = vrot.lane.b32.xlu0 %v1682, 96
      %v1737 = vpop.permute.xlu0 %1736
      %1740 = vrot.lane.b32.xlu0 %v1686, 112
      %v1741 = vpop.permute.xlu0 %1740
      %v1743 = vsel %vm372, %v1591, %v1689
      %v1744 = vsel %vm374, %v1743, %v1693
      %v1745 = vsel %vm376, %v1744, %v1697
      %v1746 = vsel %vm378, %v1745, %v1701
      %v1747 = vsel %vm380, %v1746, %v1705
      %v1748 = vsel %vm382, %v1747, %v1709
      %v1749 = vsel %vm384, %v1748, %v1713
      %v1750 = vsel %vm372, %v1659, %v1717
      %v1751 = vsel %vm374, %v1750, %v1721
      %v1752 = vsel %vm376, %v1751, %v1725
      %v1753 = vsel %vm378, %v1752, %v1729
      %v1754 = vsel %vm380, %v1753, %v1733
      %v1755 = vsel %vm382, %v1754, %v1737
      %v1756 = vsel %vm384, %v1755, %v1741
      %1765 = vrot.lane.b32.xlu0 %v1543, 127
      %v1766 = vpop.permute.xlu0 %1765
      %1767 = vrot.lane.b32.xlu0 %v1544, 127
      %v1768 = vpop.permute.xlu0 %1767
      %1769 = vrot.lane.b32.xlu0 %v1545, 127
      %v1770 = vpop.permute.xlu0 %1769
      %1771 = vrot.lane.b32.xlu0 %v1546, 127
      %v1772 = vpop.permute.xlu0 %1771
      %1773 = vrot.lane.b32.xlu0 %v1547, 127
      %v1774 = vpop.permute.xlu0 %1773
      %1775 = vrot.lane.b32.xlu0 %v1548, 127
      %v1776 = vpop.permute.xlu0 %1775
      %1777 = vrot.lane.b32.xlu0 %v1549, 127
      %v1778 = vpop.permute.xlu0 %1777
      %1779 = vrot.lane.b32.xlu0 %v1550, 127
      %v1780 = vpop.permute.xlu0 %1779
      %v1789 = vcombine.low %v1766, %v1774
      %v1790 = vcombine.high %v1766, %v1774
      %v1792 = vunpack.c.l.s4 1983009808
      %v1793 = vunpack.c.0.s8 %v1792
      %v1794 = vlaneseq
      %v1795 = vshrl.u32 %v1794, 7
      %v1796 = vsub.s32 %v1793, %v1795
      %v1797 = vrot.slane %v1789, %v1796
      %v1799 = vunpack.c.l.s4 1983009808
      %v1800 = vunpack.c.0.s8 %v1799
      %v1801 = vlaneseq
      %v1802 = vshrl.u32 %v1801, 7
      %v1803 = vsub.s32 %v1800, %v1802
      %v1804 = vrot.slane %v1790, %v1803
      %v1805 = vcombine.low %v1770, %v1778
      %v1806 = vcombine.high %v1770, %v1778
      %v1808 = vunpack.c.l.s4 1983009808
      %v1809 = vunpack.c.0.s8 %v1808
      %v1810 = vlaneseq
      %v1811 = vshrl.u32 %v1810, 7
      %v1812 = vsub.s32 %v1809, %v1811
      %v1813 = vrot.slane %v1805, %v1812
      %v1815 = vunpack.c.l.s4 1983009808
      %v1816 = vunpack.c.0.s8 %v1815
      %v1817 = vlaneseq
      %v1818 = vshrl.u32 %v1817, 7
      %v1819 = vsub.s32 %v1816, %v1818
      %v1820 = vrot.slane %v1806, %v1819
      %v1821 = vcombine.low %v1797, %v1813
      %v1822 = vcombine.high %v1797, %v1813
      %v1824 = vunpack.c.l.s4 1934713408
      %v1825 = vunpack.c.0.s8 %v1824
      %v1826 = vlaneseq
      %v1827 = vshrl.u32 %v1826, 7
      %v1828 = vsub.s32 %v1825, %v1827
      %v1829 = vrot.slane %v1821, %v1828
      %v1831 = vunpack.c.l.s4 1934713408
      %v1832 = vunpack.c.0.s8 %v1831
      %v1833 = vlaneseq
      %v1834 = vshrl.u32 %v1833, 7
      %v1835 = vsub.s32 %v1832, %v1834
      %v1836 = vrot.slane %v1822, %v1835
      %v1837 = vcombine.low %v1804, %v1820
      %v1838 = vcombine.high %v1804, %v1820
      %v1840 = vunpack.c.l.s4 1934713408
      %v1841 = vunpack.c.0.s8 %v1840
      %v1842 = vlaneseq
      %v1843 = vshrl.u32 %v1842, 7
      %v1844 = vsub.s32 %v1841, %v1843
      %v1845 = vrot.slane %v1837, %v1844
      %v1847 = vunpack.c.l.s4 1934713408
      %v1848 = vunpack.c.0.s8 %v1847
      %v1849 = vlaneseq
      %v1850 = vshrl.u32 %v1849, 7
      %v1851 = vsub.s32 %v1848, %v1850
      %v1852 = vrot.slane %v1838, %v1851
      %v1853 = vcombine.high %v1829, 0.0
      %v1854 = vcombine.high %v1836, 0.0
      %v1855 = vcombine.high %v1845, 0.0
      %v1856 = vcombine.high %v1852, 0.0
      %v1857 = vcombine.low %v1768, %v1776
      %v1858 = vcombine.high %v1768, %v1776
      %v1860 = vunpack.c.l.s4 1983009808
      %v1861 = vunpack.c.0.s8 %v1860
      %v1862 = vlaneseq
      %v1863 = vshrl.u32 %v1862, 7
      %v1864 = vsub.s32 %v1861, %v1863
      %v1865 = vrot.slane %v1857, %v1864
      %v1867 = vunpack.c.l.s4 1983009808
      %v1868 = vunpack.c.0.s8 %v1867
      %v1869 = vlaneseq
      %v1870 = vshrl.u32 %v1869, 7
      %v1871 = vsub.s32 %v1868, %v1870
      %v1872 = vrot.slane %v1858, %v1871
      %v1873 = vcombine.low %v1772, %v1780
      %v1874 = vcombine.high %v1772, %v1780
      %v1876 = vunpack.c.l.s4 1983009808
      %v1877 = vunpack.c.0.s8 %v1876
      %v1878 = vlaneseq
      %v1879 = vshrl.u32 %v1878, 7
      %v1880 = vsub.s32 %v1877, %v1879
      %v1881 = vrot.slane %v1873, %v1880
      %v1883 = vunpack.c.l.s4 1983009808
      %v1884 = vunpack.c.0.s8 %v1883
      %v1885 = vlaneseq
      %v1886 = vshrl.u32 %v1885, 7
      %v1887 = vsub.s32 %v1884, %v1886
      %v1888 = vrot.slane %v1874, %v1887
      %v1889 = vcombine.low %v1865, %v1881
      %v1890 = vcombine.high %v1865, %v1881
      %v1892 = vunpack.c.l.s4 1934713408
      %v1893 = vunpack.c.0.s8 %v1892
      %v1894 = vlaneseq
      %v1895 = vshrl.u32 %v1894, 7
      %v1896 = vsub.s32 %v1893, %v1895
      %v1897 = vrot.slane %v1889, %v1896
      %v1899 = vunpack.c.l.s4 1934713408
      %v1900 = vunpack.c.0.s8 %v1899
      %v1901 = vlaneseq
      %v1902 = vshrl.u32 %v1901, 7
      %v1903 = vsub.s32 %v1900, %v1902
      %v1904 = vrot.slane %v1890, %v1903
      %v1905 = vcombine.low %v1872, %v1888
      %v1906 = vcombine.high %v1872, %v1888
      %v1908 = vunpack.c.l.s4 1934713408
      %v1909 = vunpack.c.0.s8 %v1908
      %v1910 = vlaneseq
      %v1911 = vshrl.u32 %v1910, 7
      %v1912 = vsub.s32 %v1909, %v1911
      %v1913 = vrot.slane %v1905, %v1912
      %v1915 = vunpack.c.l.s4 1934713408
      %v1916 = vunpack.c.0.s8 %v1915
      %v1917 = vlaneseq
      %v1918 = vshrl.u32 %v1917, 7
      %v1919 = vsub.s32 %v1916, %v1918
      %v1920 = vrot.slane %v1906, %v1919
      %v1921 = vcombine.high %v1897, 0.0
      %v1922 = vcombine.high %v1904, 0.0
      %v1923 = vcombine.high %v1913, 0.0
      %v1924 = vcombine.high %v1920, 0.0
      %1926 = vrot.lane.b32.xlu0 %v1853, 16
      %v1927 = vpop.permute.xlu0 %1926
      %1930 = vrot.lane.b32.xlu0 %v1836, 32
      %v1931 = vpop.permute.xlu0 %1930
      %1934 = vrot.lane.b32.xlu0 %v1854, 48
      %v1935 = vpop.permute.xlu0 %1934
      %1938 = vrot.lane.b32.xlu0 %v1845, 64
      %v1939 = vpop.permute.xlu0 %1938
      %1942 = vrot.lane.b32.xlu0 %v1855, 80
      %v1943 = vpop.permute.xlu0 %1942
      %1946 = vrot.lane.b32.xlu0 %v1852, 96
      %v1947 = vpop.permute.xlu0 %1946
      %1950 = vrot.lane.b32.xlu0 %v1856, 112
      %v1951 = vpop.permute.xlu0 %1950
      %1954 = vrot.lane.b32.xlu0 %v1921, 16
      %v1955 = vpop.permute.xlu0 %1954
      %1958 = vrot.lane.b32.xlu0 %v1904, 32
      %v1959 = vpop.permute.xlu0 %1958
      %1962 = vrot.lane.b32.xlu0 %v1922, 48
      %v1963 = vpop.permute.xlu0 %1962
      %1966 = vrot.lane.b32.xlu0 %v1913, 64
      %v1967 = vpop.permute.xlu0 %1966
      %1970 = vrot.lane.b32.xlu0 %v1923, 80
      %v1971 = vpop.permute.xlu0 %1970
      %1974 = vrot.lane.b32.xlu0 %v1920, 96
      %v1975 = vpop.permute.xlu0 %1974
      %1978 = vrot.lane.b32.xlu0 %v1924, 112
      %v1979 = vpop.permute.xlu0 %1978
      %v1981 = vsel %vm372, %v1829, %v1927
      %v1982 = vsel %vm374, %v1981, %v1931
      %v1983 = vsel %vm376, %v1982, %v1935
      %v1984 = vsel %vm378, %v1983, %v1939
      %v1985 = vsel %vm380, %v1984, %v1943
      %v1986 = vsel %vm382, %v1985, %v1947
      %v1987 = vsel %vm384, %v1986, %v1951
      %v1988 = vsel %vm372, %v1897, %v1955
      %v1989 = vsel %vm374, %v1988, %v1959
      %v1990 = vsel %vm376, %v1989, %v1963
      %v1991 = vsel %vm378, %v1990, %v1967
      %v1992 = vsel %vm380, %v1991, %v1971
      %v1993 = vsel %vm382, %v1992, %v1975
      %v1994 = vsel %vm384, %v1993, %v1979
      %1995 = vrot.lane.b32.xlu0 %v1543, 126
      %v1996 = vpop.permute.xlu0 %1995
      %1997 = vrot.lane.b32.xlu0 %v1544, 126
      %v1998 = vpop.permute.xlu0 %1997
      %1999 = vrot.lane.b32.xlu0 %v1545, 126
      %v2000 = vpop.permute.xlu0 %1999
      %2001 = vrot.lane.b32.xlu0 %v1546, 126
      %v2002 = vpop.permute.xlu0 %2001
      %2003 = vrot.lane.b32.xlu0 %v1547, 126
      %v2004 = vpop.permute.xlu0 %2003
      %2005 = vrot.lane.b32.xlu0 %v1548, 126
      %v2006 = vpop.permute.xlu0 %2005
      %2007 = vrot.lane.b32.xlu0 %v1549, 126
      %v2008 = vpop.permute.xlu0 %2007
      %2009 = vrot.lane.b32.xlu0 %v1550, 126
      %v2010 = vpop.permute.xlu0 %2009
      %v2019 = vcombine.low %v1996, %v2004
      %v2020 = vcombine.high %v1996, %v2004
      %v2022 = vunpack.c.l.s4 1983009808
      %v2023 = vunpack.c.0.s8 %v2022
      %v2024 = vlaneseq
      %v2025 = vshrl.u32 %v2024, 7
      %v2026 = vsub.s32 %v2023, %v2025
      %v2027 = vrot.slane %v2019, %v2026
      %v2029 = vunpack.c.l.s4 1983009808
      %v2030 = vunpack.c.0.s8 %v2029
      %v2031 = vlaneseq
      %v2032 = vshrl.u32 %v2031, 7
      %v2033 = vsub.s32 %v2030, %v2032
      %v2034 = vrot.slane %v2020, %v2033
      %v2035 = vcombine.low %v2000, %v2008
      %v2036 = vcombine.high %v2000, %v2008
      %v2038 = vunpack.c.l.s4 1983009808
      %v2039 = vunpack.c.0.s8 %v2038
      %v2040 = vlaneseq
      %v2041 = vshrl.u32 %v2040, 7
      %v2042 = vsub.s32 %v2039, %v2041
      %v2043 = vrot.slane %v2035, %v2042
      %v2045 = vunpack.c.l.s4 1983009808
      %v2046 = vunpack.c.0.s8 %v2045
      %v2047 = vlaneseq
      %v2048 = vshrl.u32 %v2047, 7
      %v2049 = vsub.s32 %v2046, %v2048
      %v2050 = vrot.slane %v2036, %v2049
      %v2051 = vcombine.low %v2027, %v2043
      %v2052 = vcombine.high %v2027, %v2043
      %v2054 = vunpack.c.l.s4 1934713408
      %v2055 = vunpack.c.0.s8 %v2054
      %v2056 = vlaneseq
      %v2057 = vshrl.u32 %v2056, 7
      %v2058 = vsub.s32 %v2055, %v2057
      %v2059 = vrot.slane %v2051, %v2058
      %v2061 = vunpack.c.l.s4 1934713408
      %v2062 = vunpack.c.0.s8 %v2061
      %v2063 = vlaneseq
      %v2064 = vshrl.u32 %v2063, 7
      %v2065 = vsub.s32 %v2062, %v2064
      %v2066 = vrot.slane %v2052, %v2065
      %v2067 = vcombine.low %v2034, %v2050
      %v2068 = vcombine.high %v2034, %v2050
      %v2070 = vunpack.c.l.s4 1934713408
      %v2071 = vunpack.c.0.s8 %v2070
      %v2072 = vlaneseq
      %v2073 = vshrl.u32 %v2072, 7
      %v2074 = vsub.s32 %v2071, %v2073
      %v2075 = vrot.slane %v2067, %v2074
      %v2077 = vunpack.c.l.s4 1934713408
      %v2078 = vunpack.c.0.s8 %v2077
      %v2079 = vlaneseq
      %v2080 = vshrl.u32 %v2079, 7
      %v2081 = vsub.s32 %v2078, %v2080
      %v2082 = vrot.slane %v2068, %v2081
      %v2083 = vcombine.high %v2059, 0.0
      %v2084 = vcombine.high %v2066, 0.0
      %v2085 = vcombine.high %v2075, 0.0
      %v2086 = vcombine.high %v2082, 0.0
      %v2087 = vcombine.low %v1998, %v2006
      %v2088 = vcombine.high %v1998, %v2006
      %v2090 = vunpack.c.l.s4 1983009808
      %v2091 = vunpack.c.0.s8 %v2090
      %v2092 = vlaneseq
      %v2093 = vshrl.u32 %v2092, 7
      %v2094 = vsub.s32 %v2091, %v2093
      %v2095 = vrot.slane %v2087, %v2094
      %v2097 = vunpack.c.l.s4 1983009808
      %v2098 = vunpack.c.0.s8 %v2097
      %v2099 = vlaneseq
      %v2100 = vshrl.u32 %v2099, 7
      %v2101 = vsub.s32 %v2098, %v2100
      %v2102 = vrot.slane %v2088, %v2101
      %v2103 = vcombine.low %v2002, %v2010
      %v2104 = vcombine.high %v2002, %v2010
      %v2106 = vunpack.c.l.s4 1983009808
      %v2107 = vunpack.c.0.s8 %v2106
      %v2108 = vlaneseq
      %v2109 = vshrl.u32 %v2108, 7
      %v2110 = vsub.s32 %v2107, %v2109
      %v2111 = vrot.slane %v2103, %v2110
      %v2113 = vunpack.c.l.s4 1983009808
      %v2114 = vunpack.c.0.s8 %v2113
      %v2115 = vlaneseq
      %v2116 = vshrl.u32 %v2115, 7
      %v2117 = vsub.s32 %v2114, %v2116
      %v2118 = vrot.slane %v2104, %v2117
      %v2119 = vcombine.low %v2095, %v2111
      %v2120 = vcombine.high %v2095, %v2111
      %v2122 = vunpack.c.l.s4 1934713408
      %v2123 = vunpack.c.0.s8 %v2122
      %v2124 = vlaneseq
      %v2125 = vshrl.u32 %v2124, 7
      %v2126 = vsub.s32 %v2123, %v2125
      %v2127 = vrot.slane %v2119, %v2126
      %v2129 = vunpack.c.l.s4 1934713408
      %v2130 = vunpack.c.0.s8 %v2129
      %v2131 = vlaneseq
      %v2132 = vshrl.u32 %v2131, 7
      %v2133 = vsub.s32 %v2130, %v2132
      %v2134 = vrot.slane %v2120, %v2133
      %v2135 = vcombine.low %v2102, %v2118
      %v2136 = vcombine.high %v2102, %v2118
      %v2138 = vunpack.c.l.s4 1934713408
      %v2139 = vunpack.c.0.s8 %v2138
      %v2140 = vlaneseq
      %v2141 = vshrl.u32 %v2140, 7
      %v2142 = vsub.s32 %v2139, %v2141
      %v2143 = vrot.slane %v2135, %v2142
      %v2145 = vunpack.c.l.s4 1934713408
      %v2146 = vunpack.c.0.s8 %v2145
      %v2147 = vlaneseq
      %v2148 = vshrl.u32 %v2147, 7
      %v2149 = vsub.s32 %v2146, %v2148
      %v2150 = vrot.slane %v2136, %v2149
      %v2151 = vcombine.high %v2127, 0.0
      %v2152 = vcombine.high %v2134, 0.0
      %v2153 = vcombine.high %v2143, 0.0
      %v2154 = vcombine.high %v2150, 0.0
      %2156 = vrot.lane.b32.xlu0 %v2083, 16
      %v2157 = vpop.permute.xlu0 %2156
      %2160 = vrot.lane.b32.xlu0 %v2066, 32
      %v2161 = vpop.permute.xlu0 %2160
      %2164 = vrot.lane.b32.xlu0 %v2084, 48
      %v2165 = vpop.permute.xlu0 %2164
      %2168 = vrot.lane.b32.xlu0 %v2075, 64
      %v2169 = vpop.permute.xlu0 %2168
      %2172 = vrot.lane.b32.xlu0 %v2085, 80
      %v2173 = vpop.permute.xlu0 %2172
      %2176 = vrot.lane.b32.xlu0 %v2082, 96
      %v2177 = vpop.permute.xlu0 %2176
      %2180 = vrot.lane.b32.xlu0 %v2086, 112
      %v2181 = vpop.permute.xlu0 %2180
      %2184 = vrot.lane.b32.xlu0 %v2151, 16
      %v2185 = vpop.permute.xlu0 %2184
      %2188 = vrot.lane.b32.xlu0 %v2134, 32
      %v2189 = vpop.permute.xlu0 %2188
      %2192 = vrot.lane.b32.xlu0 %v2152, 48
      %v2193 = vpop.permute.xlu0 %2192
      %2196 = vrot.lane.b32.xlu0 %v2143, 64
      %v2197 = vpop.permute.xlu0 %2196
      %2200 = vrot.lane.b32.xlu0 %v2153, 80
      %v2201 = vpop.permute.xlu0 %2200
      %2204 = vrot.lane.b32.xlu0 %v2150, 96
      %v2205 = vpop.permute.xlu0 %2204
      %2208 = vrot.lane.b32.xlu0 %v2154, 112
      %v2209 = vpop.permute.xlu0 %2208
      %v2211 = vsel %vm372, %v2059, %v2157
      %v2212 = vsel %vm374, %v2211, %v2161
      %v2213 = vsel %vm376, %v2212, %v2165
      %v2214 = vsel %vm378, %v2213, %v2169
      %v2215 = vsel %vm380, %v2214, %v2173
      %v2216 = vsel %vm382, %v2215, %v2177
      %v2217 = vsel %vm384, %v2216, %v2181
      %v2218 = vsel %vm372, %v2127, %v2185
      %v2219 = vsel %vm374, %v2218, %v2189
      %v2220 = vsel %vm376, %v2219, %v2193
      %v2221 = vsel %vm378, %v2220, %v2197
      %v2222 = vsel %vm380, %v2221, %v2201
      %v2223 = vsel %vm382, %v2222, %v2205
      %v2224 = vsel %vm384, %v2223, %v2209
      %v2225 = vld [vmem:[%s2] sm:$0xff]
      %v2228 = vrot.slane %v623, 4
      %v2229 = vrot.slane %v630, 4
      %v2234 = vrot.slane %v1305, 4
      %v2235 = vrot.slane %v1312, 4
      %vm2238 = vcmask 1043456
      %v2239 = vsel %vm2238, %v385, %v2228
      %v2240 = vsel %vm2238, %v392, %v2229
      %v2241 = vsel %vm2238, %v1067, %v2234
      %v2242 = vsel %vm2238, %v1074, %v2235
      %v2243 = vpack.c.bf16 %v2241, %v2239
      %v2244 = vpack.c.bf16 %v2242, %v2240
      %v2245 = vld [vmem:[%s1] sm:$0xf]
      %2247 = vset.pattern.permute.xlu0 0
      %2248 = vperm.xlu0 %2247, %v2225
      %v2249 = vpop.permute.xlu0 %2248
      %v2252 = vsel %vm372, %v2245, 0
      %2254 = vmatprep.subr.bf16.mxu0 %v2244
      %2255 = vmatpush1.bf16.msra.mxu0 %v2243
      %2256 = vmatprep.subr.bf16.mxu0 0
      %2257 = vmatpush1.bf16.msra.mxu0 0
      %2258 = vmatprep.subr.bf16.mxu0 0
      %2259 = vmatpush1.bf16.msra.mxu0 0
      %2260 = vmatprep.subr.bf16.mxu0 0
      %2261 = vmatpush1.bf16.msra.mxu0 0
      %2262 = vmatprep.subr.bf16.mxu0 0
      %2263 = vmatpush1.bf16.msra.mxu0 0
      %2264 = vmatprep.subr.bf16.mxu0 0
      %2265 = vmatpush1.bf16.msra.mxu0 0
      %2266 = vmatprep.subr.bf16.mxu0 0
      %2267 = vmatpush1.bf16.msra.mxu0 0
      %2268 = vmatprep.subr.bf16.mxu0 0
      %2269 = vmatpush1.bf16.msra.mxu0 0
      %2270 = vmatprep.subr.bf16.mxu0 0
      %2271 = vmatpush1.bf16.msra.mxu0 0
      %2272 = vmatprep.subr.bf16.mxu0 0
      %2273 = vmatpush1.bf16.msra.mxu0 0
      %2274 = vmatprep.subr.bf16.mxu0 0
      %2275 = vmatpush1.bf16.msra.mxu0 0
      %2276 = vmatprep.subr.bf16.mxu0 0
      %2277 = vmatpush1.bf16.msra.mxu0 0
      %2278 = vmatprep.subr.bf16.mxu0 0
      %2279 = vmatpush1.bf16.msra.mxu0 0
      %2280 = vmatprep.subr.bf16.mxu0 0
      %2281 = vmatpush1.bf16.msra.mxu0 0
      %2282 = vmatprep.subr.bf16.mxu0 0
      %2283 = vmatpush1.bf16.msra.mxu0 0
      %2284 = vmatprep.subr.bf16.mxu0 0
      %2285 = vmatpush1.bf16.msra.mxu0 0
      %2286 = vmatprep.mubr.bf16.mxu0 0
      %2287 = vmatmul.mubr.bf16.gmra.mrb[0].mxu0 %v2252
      %v2288 = vpop.f32.mrb[0].mxu0
      %v2289 = vadd.f32 %v2249, %v2288
      %v2290 = vpop.f32.mrb[0].mxu0
      %v2291 = vadd.f32 %v2249, %v2290
      %v2292 = vpop.f32.mrb[0].mxu0
      %v2293 = vpop.f32.mrb[0].mxu0
      %2294 = vdwg.mxu0
      %v2295 = vmax.f32 %v2289, 0.0
      %v2296 = vmax.f32 %v2291, 0.0
      %2297 = vst [vmem:[%s170] sm:$0xff] %v2295
      %2298 = vst [vmem:[%s170 + $0x8] sm:$0xff] %v2296
      %v2301 = vrot.slane %v853, 4
      %v2302 = vrot.slane %v860, 4
      %v2307 = vrot.slane %v1535, 4
      %v2308 = vrot.slane %v1542, 4
      %v2311 = vsel %vm2238, %v623, %v2301
      %v2312 = vsel %vm2238, %v630, %v2302
      %v2313 = vsel %vm2238, %v1305, %v2307
      %v2314 = vsel %vm2238, %v1312, %v2308
      %v2315 = vpack.c.bf16 %v2313, %v2311
      %v2316 = vpack.c.bf16 %v2314, %v2312
      %s2317 = scalar_lea.vmem %s1, 4
      %v2318 = vld [vmem:[%s2317] sm:$0xf]
      %v2320 = vsel %vm372, %v2318, 0
      %2322 = vmatprep.subr.bf16.mxu0 %v2316
      %2323 = vmatpush1.bf16.msra.mxu0 %v2315
      %2324 = vmatprep.subr.bf16.mxu0 0
      %2325 = vmatpush1.bf16.msra.mxu0 0
      %2326 = vmatprep.subr.bf16.mxu0 0
      %2327 = vmatpush1.bf16.msra.mxu0 0
      %2328 = vmatprep.subr.bf16.mxu0 0
      %2329 = vmatpush1.bf16.msra.mxu0 0
      %2330 = vmatprep.subr.bf16.mxu0 0
      %2331 = vmatpush1.bf16.msra.mxu0 0
      %2332 = vmatprep.subr.bf16.mxu0 0
      %2333 = vmatpush1.bf16.msra.mxu0 0
      %2334 = vmatprep.subr.bf16.mxu0 0
      %2335 = vmatpush1.bf16.msra.mxu0 0
      %2336 = vmatprep.subr.bf16.mxu0 0
      %2337 = vmatpush1.bf16.msra.mxu0 0
      %2338 = vmatprep.subr.bf16.mxu0 0
      %2339 = vmatpush1.bf16.msra.mxu0 0
      %2340 = vmatprep.subr.bf16.mxu0 0
      %2341 = vmatpush1.bf16.msra.mxu0 0
      %2342 = vmatprep.subr.bf16.mxu0 0
      %2343 = vmatpush1.bf16.msra.mxu0 0
      %2344 = vmatprep.subr.bf16.mxu0 0
      %2345 = vmatpush1.bf16.msra.mxu0 0
      %2346 = vmatprep.subr.bf16.mxu0 0
      %2347 = vmatpush1.bf16.msra.mxu0 0
      %2348 = vmatprep.subr.bf16.mxu0 0
      %2349 = vmatpush1.bf16.msra.mxu0 0
      %2350 = vmatprep.subr.bf16.mxu0 0
      %2351 = vmatpush1.bf16.msra.mxu0 0
      %2352 = vmatprep.subr.bf16.mxu0 0
      %2353 = vmatpush1.bf16.msra.mxu0 0
      %2354 = vmatprep.mubr.bf16.mxu0 0
      %2355 = vmatmul.mubr.bf16.gmra.mrb[0].mxu0 %v2320
      %v2356 = vpop.f32.mrb[0].mxu0
      %v2357 = vadd.f32 %v2249, %v2356
      %v2358 = vpop.f32.mrb[0].mxu0
      %v2359 = vadd.f32 %v2249, %v2358
      %v2360 = vpop.f32.mrb[0].mxu0
      %v2361 = vpop.f32.mrb[0].mxu0
      %2362 = vdwg.mxu0
      %v2363 = vmax.f32 %v2357, 0.0
      %v2364 = vmax.f32 %v2359, 0.0
      %s2365 = scalar_lea.vmem %s170, 16
      %2366 = vst [vmem:[%s2365] sm:$0xff] %v2363
      %2367 = vst [vmem:[%s2365 + $0x8] sm:$0xff] %v2364
      %v2370 = vrot.slane %v1987, 4
      %v2371 = vrot.slane %v1994, 4
      %v2374 = vsel %vm2238, %v1749, %v2370
      %v2375 = vsel %vm2238, %v1756, %v2371
      %v2376 = vpack.c.bf16 %v2374, %v2241
      %v2377 = vpack.c.bf16 %v2375, %v2242
      %s2378 = scalar_lea.vmem %s1, 8
      %v2379 = vld [vmem:[%s2378] sm:$0xf]
      %v2381 = vsel %vm372, %v2379, 0
      %2383 = vmatprep.subr.bf16.mxu0 %v2377
      %2384 = vmatpush1.bf16.msra.mxu0 %v2376
      %2385 = vmatprep.subr.bf16.mxu0 0
      %2386 = vmatpush1.bf16.msra.mxu0 0
      %2387 = vmatprep.subr.bf16.mxu0 0
      %2388 = vmatpush1.bf16.msra.mxu0 0
      %2389 = vmatprep.subr.bf16.mxu0 0
      %2390 = vmatpush1.bf16.msra.mxu0 0
      %2391 = vmatprep.subr.bf16.mxu0 0
      %2392 = vmatpush1.bf16.msra.mxu0 0
      %2393 = vmatprep.subr.bf16.mxu0 0
      %2394 = vmatpush1.bf16.msra.mxu0 0
      %2395 = vmatprep.subr.bf16.mxu0 0
      %2396 = vmatpush1.bf16.msra.mxu0 0
      %2397 = vmatprep.subr.bf16.mxu0 0
      %2398 = vmatpush1.bf16.msra.mxu0 0
      %2399 = vmatprep.subr.bf16.mxu0 0
      %2400 = vmatpush1.bf16.msra.mxu0 0
      %2401 = vmatprep.subr.bf16.mxu0 0
      %2402 = vmatpush1.bf16.msra.mxu0 0
      %2403 = vmatprep.subr.bf16.mxu0 0
      %2404 = vmatpush1.bf16.msra.mxu0 0
      %2405 = vmatprep.subr.bf16.mxu0 0
      %2406 = vmatpush1.bf16.msra.mxu0 0
      %2407 = vmatprep.subr.bf16.mxu0 0
      %2408 = vmatpush1.bf16.msra.mxu0 0
      %2409 = vmatprep.subr.bf16.mxu0 0
      %2410 = vmatpush1.bf16.msra.mxu0 0
      %2411 = vmatprep.subr.bf16.mxu0 0
      %2412 = vmatpush1.bf16.msra.mxu0 0
      %2413 = vmatprep.subr.bf16.mxu0 0
      %2414 = vmatpush1.bf16.msra.mxu0 0
      %2415 = vmatprep.mubr.bf16.mxu0 0
      %2416 = vmatmul.mubr.bf16.gmra.mrb[0].mxu0 %v2381
      %v2417 = vpop.f32.mrb[0].mxu0
      %v2418 = vadd.f32 %v2249, %v2417
      %v2419 = vpop.f32.mrb[0].mxu0
      %v2420 = vadd.f32 %v2249, %v2419
      %v2421 = vpop.f32.mrb[0].mxu0
      %v2422 = vpop.f32.mrb[0].mxu0
      %2423 = vdwg.mxu0
      %v2424 = vmax.f32 %v2418, 0.0
      %v2425 = vmax.f32 %v2420, 0.0
      %s2426 = scalar_lea.vmem %s170, 32
      %2427 = vst [vmem:[%s2426] sm:$0xff] %v2424
      %2428 = vst [vmem:[%s2426 + $0x8] sm:$0xff] %v2425
      %v2431 = vrot.slane %v2217, 4
      %v2432 = vrot.slane %v2224, 4
      %v2435 = vsel %vm2238, %v1987, %v2431
      %v2436 = vsel %vm2238, %v1994, %v2432
      %v2437 = vpack.c.bf16 %v2435, %v2313
      %v2438 = vpack.c.bf16 %v2436, %v2314
      %s2439 = scalar_lea.vmem %s1, 12
      %v2440 = vld [vmem:[%s2439] sm:$0xf]
      %v2442 = vsel %vm372, %v2440, 0
      %2444 = vmatprep.subr.bf16.mxu0 %v2438
      %2445 = vmatpush1.bf16.msra.mxu0 %v2437
      %2446 = vmatprep.subr.bf16.mxu0 0
      %2447 = vmatpush1.bf16.msra.mxu0 0
      %2448 = vmatprep.subr.bf16.mxu0 0
      %2449 = vmatpush1.bf16.msra.mxu0 0
      %2450 = vmatprep.subr.bf16.mxu0 0
      %2451 = vmatpush1.bf16.msra.mxu0 0
      %2452 = vmatprep.subr.bf16.mxu0 0
      %2453 = vmatpush1.bf16.msra.mxu0 0
      %2454 = vmatprep.subr.bf16.mxu0 0
      %2455 = vmatpush1.bf16.msra.mxu0 0
      %2456 = vmatprep.subr.bf16.mxu0 0
      %2457 = vmatpush1.bf16.msra.mxu0 0
      %2458 = vmatprep.subr.bf16.mxu0 0
      %2459 = vmatpush1.bf16.msra.mxu0 0
      %2460 = vmatprep.subr.bf16.mxu0 0
      %2461 = vmatpush1.bf16.msra.mxu0 0
      %2462 = vmatprep.subr.bf16.mxu0 0
      %2463 = vmatpush1.bf16.msra.mxu0 0
      %2464 = vmatprep.subr.bf16.mxu0 0
      %2465 = vmatpush1.bf16.msra.mxu0 0
      %2466 = vmatprep.subr.bf16.mxu0 0
      %2467 = vmatpush1.bf16.msra.mxu0 0
      %2468 = vmatprep.subr.bf16.mxu0 0
      %2469 = vmatpush1.bf16.msra.mxu0 0
      %2470 = vmatprep.subr.bf16.mxu0 0
      %2471 = vmatpush1.bf16.msra.mxu0 0
      %2472 = vmatprep.subr.bf16.mxu0 0
      %2473 = vmatpush1.bf16.msra.mxu0 0
      %2474 = vmatprep.subr.bf16.mxu0 0
      %2475 = vmatpush1.bf16.msra.mxu0 0
      %2476 = vmatprep.mubr.bf16.mxu0 0
      %2477 = vmatmul.mubr.bf16.gmra.mrb[0].mxu0 %v2442
      %v2478 = vpop.f32.mrb[0].mxu0
      %v2479 = vadd.f32 %v2249, %v2478
      %v2480 = vpop.f32.mrb[0].mxu0
      %v2481 = vadd.f32 %v2249, %v2480
      %v2482 = vpop.f32.mrb[0].mxu0
      %v2483 = vpop.f32.mrb[0].mxu0
      %2484 = vdwg.mxu0
      %v2485 = vmax.f32 %v2479, 0.0
      %v2486 = vmax.f32 %v2481, 0.0
      %s2487 = scalar_lea.vmem %s170, 48
      %2488 = vst [vmem:[%s2487] sm:$0xff] %v2485
      %2489 = vst [vmem:[%s2487 + $0x8] sm:$0xff] %v2486
      %p2490 = scmp.lt.s32.totalorder %s14, 1
      %s2491 = scalar_select %p2490, %s14, 1
      %s2492 = smul.addr %s2491, 8
      %s2493 = smul.addr %s2492, 8
      %s2494 = scalar_lea.vmem %s3, %s2493
      // Predicated region
      $region33: #{dc_forward.1} parent=31 // pred_check
        %p2495 = pneg %p100
      $region34: #{dc_forward.1} parent=31 // pred_check_branch
        %2497 = sbr.rel (%p2495) target = $region36
      $region35: #{dc_forward.1} parent=31 // pred_region
        _
      $region36: #{dc_forward.1} parent=31 // pred_fallthru
        _
    $region32: #{dc_forward.1} parent=5 // pred_fallthru
      _
    %p2498 = scmp.le.s32.totalorder 2, %s9
    // Predicated region
    $region37: #{dc_forward.1} parent=5 // pred_check
      %p2499 = pneg %p2498
    $region38: #{dc_forward.1} parent=5 // pred_check_branch
      %2501 = sbr.rel (%p2499) target = $region40
    $region39: #{dc_forward.1} parent=5 // pred_region
      %s2502 = ssub.s32 %s9, 2
      // Predicated region
      $region41: #{dc_forward.1} parent=39 // pred_check
        %p2503 = pneg %p106
      $region42: #{dc_forward.1} parent=39 // pred_check_branch
        %2505 = sbr.rel (%p2503) target = $region44
      $region43: #{dc_forward.1} parent=39 // pred_region
        %p2506 = scmp.lt.s32.totalorder %s15, 1
        %s2507 = scalar_select %p2506, %s15, 1
        %s2508 = smul.addr %s2507, 8
        %s2509 = smul.addr %s2508, 8
        %s2510 = scalar_lea.vmem %s3, %s2509
      $region44: #{dc_forward.1} parent=39 // pred_fallthru
        _
    $region40: #{dc_forward.1} parent=5 // pred_fallthru
      _
  $region6: #{dc_forward.1} parent=0 // loop_footer
    %s13 = sadd.s32 1, %s9
  $region7: #{dc_forward.1} parent=0 // loop_footer_branch
    %8 = sbr.rel target = $region3
  $region8: #{dc_forward.1} parent=0 // loop_exit
    _

</llo_original>
